<compile_context>
chip_gen: v7x
topology: tpu7x:2x2x1
jax: 0.10.0
libtpu: 0.0.40
codegen_flags: <defaults>
</compile_context>

<pallas_src>
import functools

import jax
import jax.numpy as jnp
from jax import lax
from jax.experimental import pallas as pl
from jax.experimental.pallas import tpu as pltpu

F32 = jnp.float32
BF16 = jnp.bfloat16
_VMEM_CONV = 32 * 1024 * 1024
_VMEM_FC = 40 * 1024 * 1024


def _round_up(x, m):
    return (x + m - 1) // m * m


def _conv_weight_matrix(w_oihw):
    # (Cout, Cin, kh, kw) -> (Cout, kh*kw*Cin); column order (ky, kx, cin).
    cout = w_oihw.shape[0]
    return jnp.transpose(w_oihw, (0, 2, 3, 1)).reshape(cout, -1)


def _conv1_pool_weight(w1):
    # conv1 (6,1,3,3) reorganized for the parity-split input: rows = (dy,dx,co) pooling
    # branch, cols = (dpi,dpj) tap x (ry,rx) parity channel -> (24, 16).
    w = jnp.zeros((2, 2, 6, 2, 2, 2, 2), F32)
    for dy in range(2):
        for dx in range(2):
            for ky in range(3):
                for kx in range(3):
                    r, c = dy + ky, dx + kx
                    w = w.at[dy, dx, :, r // 2, c // 2, r % 2, c % 2].set(w1[:, 0, ky, kx])
    return w.reshape(24, 16)


def _build_patch(xcat, offsets, tile):
    # xcat: (C, 2*TILE); returns (len(offsets)*C, TILE) with static lane-shifted taps.
    return jnp.concatenate([xcat[:, o:o + tile] for o in offsets], axis=0)


# ---------------------------------------------------------------------------
# Kernel 1: conv1 (1->6, k=3, valid) fused with MaxPool2d(2,2), parity-split input.
# ---------------------------------------------------------------------------
def _conv1_pool_kernel(xa_ref, xb_ref, w_ref, b_ref, o_ref, *, wh, tile):
    xcat = jnp.concatenate([xa_ref[...], xb_ref[...]], axis=1)            # (4, 2T) bf16
    patch = _build_patch(xcat, (0, 1, wh, wh + 1), tile)                  # (16, T)
    y = jnp.dot(w_ref[...], patch, preferred_element_type=F32)            # (24, T)
    m = jnp.maximum(jnp.maximum(y[0:6], y[6:12]),
                    jnp.maximum(y[12:18], y[18:24]))                      # pool over 4 branches
    o_ref[...] = (m + b_ref[...]).astype(o_ref.dtype)


# ---------------------------------------------------------------------------
# Kernel 2: conv2 (6->3) + masked BN batch-stat partials (two-pass BN, pass 1).
# ---------------------------------------------------------------------------
def _conv2_stats_kernel(xa_ref, xb_ref, w_ref, b_ref, mask_ref,
                        o_ref, s_ref, q_ref, *, wh, tile):
    xcat = jnp.concatenate([xa_ref[...], xb_ref[...]], axis=1)            # (6, 2T) bf16
    offs = tuple(ky * wh + kx for ky in range(3) for kx in range(3))
    patch = _build_patch(xcat, offs, tile)                                # (54, T)
    y = jnp.dot(w_ref[...], patch, preferred_element_type=F32) + b_ref[...]
    o_ref[...] = y.astype(o_ref.dtype)
    ym = y * mask_ref[...]                                                # zero out garbage cols
    s_ref[...] = jnp.sum(ym, axis=1, keepdims=True)                       # (3, 1)
    q_ref[...] = jnp.sum(ym * ym, axis=1, keepdims=True)                  # (3, 1)


# ---------------------------------------------------------------------------
# Kernel 3: BN affine + ReLU folded into conv3 (3->6).
# ---------------------------------------------------------------------------
def _bn_relu_conv3_kernel(xa_ref, xb_ref, scale_ref, shift_ref, w_ref, b_ref,
                          o_ref, *, wh, tile):
    xcat = jnp.concatenate([xa_ref[...], xb_ref[...]], axis=1).astype(F32)
    xcat = jnp.maximum(xcat * scale_ref[...] + shift_ref[...], 0.0).astype(BF16)
    offs = tuple(ky * wh + kx for ky in range(3) for kx in range(3))
    patch = _build_patch(xcat, offs, tile)                                # (27, T)
    y = jnp.dot(w_ref[...], patch, preferred_element_type=F32) + b_ref[...]
    o_ref[...] = y.astype(o_ref.dtype)


def _x_specs(cin, tile):
    # Two views of the same activation array: tile i plus tile i+1 (the halo source).
    return [pl.BlockSpec((None, cin, tile), lambda b, i: (b, 0, i)),
            pl.BlockSpec((None, cin, tile), lambda b, i: (b, 0, i + 1))]


def _conv_params():
    return pltpu.CompilerParams(dimension_semantics=("parallel", "parallel"),
                                vmem_limit_bytes=_VMEM_CONV)


def _conv1_pool_call(xpar, w24, b6, *, wh, tile, lout_pad):
    bn = xpar.shape[0]
    gm = lout_pad // tile
    return pl.pallas_call(
        functools.partial(_conv1_pool_kernel, wh=wh, tile=tile),
        out_shape=jax.ShapeDtypeStruct((bn, 6, lout_pad), BF16),
        grid=(bn, gm),
        in_specs=_x_specs(4, tile) + [
            pl.BlockSpec((24, 16), lambda b, i: (0, 0)),
            pl.BlockSpec((6, 1), lambda b, i: (0, 0)),
        ],
        out_specs=pl.BlockSpec((None, 6, tile), lambda b, i: (b, 0, i)),
        compiler_params=_conv_params(),
    )(xpar, xpar, w24, b6)


def _conv2_stats_call(pooled, w_mat, b3, mask, *, wh, tile, lout_pad):
    bn = pooled.shape[0]
    gm = lout_pad // tile
    return pl.pallas_call(
        functools.partial(_conv2_stats_kernel, wh=wh, tile=tile),
        out_shape=(jax.ShapeDtypeStruct((bn, 3, lout_pad), BF16),
                   jax.ShapeDtypeStruct((bn, gm, 3, 1), F32),
                   jax.ShapeDtypeStruct((bn, gm, 3, 1), F32)),
        grid=(bn, gm),
        in_specs=_x_specs(6, tile) + [
            pl.BlockSpec((3, 54), lambda b, i: (0, 0)),
            pl.BlockSpec((3, 1), lambda b, i: (0, 0)),
            pl.BlockSpec((1, tile), lambda b, i: (0, i)),
        ],
        out_specs=(pl.BlockSpec((None, 3, tile), lambda b, i: (b, 0, i)),
                   pl.BlockSpec((None, None, 3, 1), lambda b, i: (b, i, 0, 0)),
                   pl.BlockSpec((None, None, 3, 1), lambda b, i: (b, i, 0, 0))),
        compiler_params=_conv_params(),
    )(pooled, pooled, w_mat, b3, mask)


def _bn_relu_conv3_call(raw2, scale, shift, w_mat, b6, *, wh, tile, lout_pad):
    bn = raw2.shape[0]
    gm = lout_pad // tile
    return pl.pallas_call(
        functools.partial(_bn_relu_conv3_kernel, wh=wh, tile=tile),
        out_shape=jax.ShapeDtypeStruct((bn, 6, lout_pad), BF16),
        grid=(bn, gm),
        in_specs=_x_specs(3, tile) + [
            pl.BlockSpec((3, 1), lambda b, i: (0, 0)),
            pl.BlockSpec((3, 1), lambda b, i: (0, 0)),
            pl.BlockSpec((6, 27), lambda b, i: (0, 0)),
            pl.BlockSpec((6, 1), lambda b, i: (0, 0)),
        ],
        out_specs=pl.BlockSpec((None, 6, tile), lambda b, i: (b, 0, i)),
        compiler_params=_conv_params(),
    )(raw2, raw2, scale, shift, w_mat, b6)


# ---------------------------------------------------------------------------
# Kernel 4: fc1 K-tiled streaming partials (bf16 weight, f32 accumulate), two-way
# K split on a leading "parallel" axis so v7x's two TensorCores share the stream.
# ---------------------------------------------------------------------------
def _fc1_partial_kernel(x_ref, w_ref, o_ref):
    @pl.when(pl.program_id(1) == 0)
    def _init():
        o_ref[...] = jnp.zeros_like(o_ref)
    o_ref[...] += jnp.dot(x_ref[...], w_ref[...], preferred_element_type=F32)


def _fc1_partials_call(feat, w1t, *, tile_k):
    bn, kf_pad = feat.shape
    h1 = w1t.shape[1]
    g = kf_pad // tile_k
    gh = g // 2
    w_kwargs = {}
    if gh >= 4:                       # deepen the weight-stream pipeline only when useful
        w_kwargs["pipeline_mode"] = pl.Buffered(3)
    w_spec = pl.BlockSpec((tile_k, h1), lambda c, k: (c * gh + k, 0), **w_kwargs)
    return pl.pallas_call(
        _fc1_partial_kernel,
        out_shape=jax.ShapeDtypeStruct((2, bn, h1), F32),
        grid=(2, gh),
        in_specs=[pl.BlockSpec((bn, tile_k), lambda c, k: (0, c * gh + k)), w_spec],
        out_specs=pl.BlockSpec((None, bn, h1), lambda c, k: (c, 0, 0)),
        compiler_params=pltpu.CompilerParams(
            dimension_semantics=("parallel", "arbitrary"),
            vmem_limit_bytes=_VMEM_FC),
    )(feat, w1t)


# ---------------------------------------------------------------------------
# Parameters + forward pass
# ---------------------------------------------------------------------------
def init_params(key, in_hw):
    hp = (in_hw - 2) // 2
    h3 = hp - 4
    flat = 6 * h3 * h3
    ks = jax.random.split(key, 12)
    n = lambda k, s, scale=0.1: (scale * jax.random.normal(k, s)).astype(F32)
    bf = lambda a: a.astype(BF16).astype(F32)          # store bf16-representable values
    # fc1 weight: pre-transposed + pre-padded ONCE at init (no per-forward pad copy).
    tile_k0 = min(32768, _round_up(flat, 128))
    kf_pad = _round_up(flat, 2 * tile_k0)
    fc1 = (0.1 * jax.random.normal(ks[8], (120, flat))).astype(BF16)
    fc1_t = jnp.pad(fc1.T, ((0, kf_pad - flat), (0, 0)))
    return {
        "conv1_w": bf(n(ks[0], (6, 1, 3, 3))), "conv1_b": n(ks[1], (6,)),
        "conv2_w": bf(n(ks[2], (3, 6, 3, 3))), "conv2_b": n(ks[3], (3,)),
        "bn_gamma": 1.0 + n(ks[4], (3,)), "bn_beta": n(ks[5], (3,)),
        "conv3_w": bf(n(ks[6], (6, 3, 3, 3))), "conv3_b": n(ks[7], (6,)),
        "fc1_wt": fc1_t, "fc1_b": n(ks[9], (120,)),
        "fc2_w": n(ks[10], (2, 120)), "fc2_b": n(ks[11], (2,)),
    }


def mynet1_forward(params, x_nchw, *, tile_cap=16384):
    x = x_nchw.astype(F32)
    B, _, H, W = x.shape
    Hp, Wp = (H - 2) // 2, (W - 2) // 2          # pooled valid size
    Hh, Wh = Hp + 1, Wp + 1                      # parity sub-image size (= flat row period)
    He, We = 2 * Hh, 2 * Wh

    # ---- 1x parity split of the input (channel = 2*row_parity + col_parity) ----
    xr = x[:, 0, :He, :We].reshape(B, Hh, 2, Wh, 2)
    xpar = jnp.transpose(xr, (0, 2, 4, 1, 3)).reshape(B, 4, Hh * Wh)

    HoB, WoB = Hp - 2, Wp - 2                    # conv2 valid output
    HoC, WoC = Hp - 4, Wp - 4                    # conv3 valid output

    tile = min(tile_cap, _round_up(Hp * Wh, 128))
    tile = max(tile, _round_up(2 * Wh + 2, 128))  # tile must cover the tap halo

    lc = _round_up(HoC * Wh, tile)               # conv3 output flat length
    lb = lc + tile                               # conv2 output (= conv3 input) flat length
    la = lb + tile                               # pooled output (= conv2 input) flat length
    lin = la + tile                              # parity input flat length

    xpar = jnp.pad(xpar, ((0, 0), (0, 0), (0, lin - Hh * Wh))).astype(BF16)

    # ---- conv1 + MaxPool2d(2,2), fused, no patch materialization ----
    w_a = _conv1_pool_weight(params["conv1_w"]).astype(BF16)
    pooled = _conv1_pool_call(xpar, w_a, params["conv1_b"].reshape(6, 1),
                              wh=Wh, tile=tile, lout_pad=la)          # (B, 6, la) bf16

    # ---- conv2 + masked BN batch statistics ----
    pos = jnp.arange(lb, dtype=jnp.int32)
    mask = (((pos // Wh) < HoB) & ((pos % Wh) < WoB)).astype(F32).reshape(1, lb)
    w_b = _conv_weight_matrix(params["conv2_w"]).astype(BF16)
    raw2, ssum, ssq = _conv2_stats_call(pooled, w_b, params["conv2_b"].reshape(3, 1),
                                        mask, wh=Wh, tile=tile, lout_pad=lb)

    count = B * HoB * WoB
    s = jnp.sum(ssum, axis=(0, 1))[:, 0]
    q = jnp.sum(ssq, axis=(0, 1))[:, 0]
    mean = s / count
    var = jnp.maximum(q / count - mean * mean, 0.0)                   # biased (PyTorch BN)
    scale = params["bn_gamma"] / jnp.sqrt(var + 1e-5)
    shift = params["bn_beta"] - mean * scale

    # ---- BN affine + ReLU + conv3, fused ----
    w_c = _conv_weight_matrix(params["conv3_w"]).astype(BF16)
    raw3 = _bn_relu_conv3_call(raw2, scale.reshape(3, 1).astype(F32),
                               shift.reshape(3, 1).astype(F32),
                               w_c, params["conv3_b"].reshape(6, 1),
                               wh=Wh, tile=tile, lout_pad=lc)         # (B, 6, lc) bf16

    # ---- flatten in PyTorch NCHW order (strip garbage columns / row padding) ----
    feat = raw3[:, :, :HoC * Wh].reshape(B, 6, HoC, Wh)[:, :, :, :WoC]
    feat = feat.reshape(B, 6 * HoC * WoC)                             # bf16

    # ---- fc1 (K-tiled streaming partials) + bias/ReLU/fc2 finalize ----
    w1t = params["fc1_wt"]
    kf, kf_pad = feat.shape[1], w1t.shape[0]
    feat = jnp.pad(feat, ((0, 0), (0, kf_pad - kf)))
    tile_k = min(32768, kf_pad // 2)
    partials = _fc1_partials_call(feat, w1t, tile_k=tile_k)           # (2, B, 120) f32
    h = jnp.maximum(partials[0] + partials[1] + params["fc1_b"], 0.0)
    return jnp.dot(h, params["fc2_w"].T) + params["fc2_b"]


# ---------------------------------------------------------------------------
# Pure-JAX reference (PyTorch semantics) for a sanity check at the toy size.
# ---------------------------------------------------------------------------
def _reference_forward(params, x_nchw):
    dn = ("NCHW", "OIHW", "NCHW")
    hp = lax.Precision.HIGHEST
    x = x_nchw.astype(F32)
    y = lax.conv_general_dilated(x, params["conv1_w"], (1, 1), "VALID",
                                 dimension_numbers=dn, precision=hp)
    y = y + params["conv1_b"][None, :, None, None]
    y = lax.reduce_window(y, -jnp.inf, lax.max, (1, 1, 2, 2), (1, 1, 2, 2), "VALID")
    y = lax.conv_general_dilated(y, params["conv2_w"], (1, 1), "VALID",
                                 dimension_numbers=dn, precision=hp)
    y = y + params["conv2_b"][None, :, None, None]
    mean = y.mean(axis=(0, 2, 3), keepdims=True)
    var = ((y - mean) ** 2).mean(axis=(0, 2, 3), keepdims=True)
    y = (y - mean) / jnp.sqrt(var + 1e-5)
    y = y * params["bn_gamma"][None, :, None, None] + params["bn_beta"][None, :, None, None]
    y = jnp.maximum(y, 0.0)
    y = lax.conv_general_dilated(y, params["conv3_w"], (1, 1), "VALID",
                                 dimension_numbers=dn, precision=hp)
    y = y + params["conv3_b"][None, :, None, None]
    flat = y.reshape(y.shape[0], -1)
    w1 = params["fc1_wt"][:flat.shape[1], :].astype(F32)
    h = jnp.maximum(jnp.dot(flat, w1, precision=hp) + params["fc1_b"], 0.0)
    return jnp.dot(h, params["fc2_w"].T, precision=hp) + params["fc2_b"]


if __name__ == "__main__":
    key = jax.random.PRNGKey(0)
    k_x, k_p = jax.random.split(key)

    B, H = 2, 16                       # small spatial stand-in for the module's 1024
    x = jax.random.normal(k_x, (B, 1, H, H), dtype=F32)     # NCHW like PyTorch
    x = x.astype(BF16).astype(F32)     # bf16-representable input (kernel streams bf16)
    params = init_params(k_p, H)

    out = jax.jit(mynet1_forward)(params, x)
    out = jax.block_until_ready(out)

    assert out.shape == (B, 2) and out.dtype == F32
    assert bool(jnp.all(jnp.isfinite(out)))

    ref = _reference_forward(params, x)
    assert bool(jnp.allclose(out, ref, rtol=3e-2, atol=3e-2)), (out, ref)

    print("KERNEL_OK")
</pallas_src>

<mosaic_0001>
module attributes {stable_mosaic.version = 11 : i64} {
  func.func @_conv1_pool_kernel(%arg0: i32, %arg1: i32, %arg2: memref<1x4x128xbf16, #tpu.memory_space<vmem>>, %arg3: memref<1x4x128xbf16, #tpu.memory_space<vmem>>, %arg4: memref<24x16xbf16, #tpu.memory_space<vmem>>, %arg5: memref<6x1xf32, #tpu.memory_space<vmem>>, %arg6: memref<1x6x128xbf16, #tpu.memory_space<vmem>>) attributes {dimension_semantics = [#tpu.dimension_semantics<parallel>, #tpu.dimension_semantics<parallel>], iteration_bounds = array<i64: 2, 3>, scalar_prefetch = 0 : i64, scratch_operands = 0 : i64, tpu.core_type = #tpu.core_type<tc>, window_params = [{transform_indices = @transform_0, window_bounds = array<i64: 1, 4, 128>}, {transform_indices = @transform_1, window_bounds = array<i64: 1, 4, 128>}, {pipeline_mode = #tpu.pipeline_mode<synchronous>, transform_indices = @transform_2, window_bounds = array<i64: 24, 16>}, {pipeline_mode = #tpu.pipeline_mode<synchronous>, transform_indices = @transform_3, window_bounds = array<i64: 6, 1>}, {transform_indices = @transform_4, window_bounds = array<i64: 1, 6, 128>}]} {
    %c0 = arith.constant 0 : index
    %c0_0 = arith.constant 0 : index
    %c0_1 = arith.constant 0 : index
    %0 = vector.load %arg2[%c0, %c0_0, %c0_1] : memref<1x4x128xbf16, #tpu.memory_space<vmem>>, vector<1x4x128xbf16>
    %1 = vector.shape_cast %0 : vector<1x4x128xbf16> to vector<4x128xbf16>
    %c0_2 = arith.constant 0 : index
    %c0_3 = arith.constant 0 : index
    %c0_4 = arith.constant 0 : index
    %2 = vector.load %arg3[%c0_2, %c0_3, %c0_4] : memref<1x4x128xbf16, #tpu.memory_space<vmem>>, vector<1x4x128xbf16>
    %3 = vector.shape_cast %2 : vector<1x4x128xbf16> to vector<4x128xbf16>
    %4 = tpu.concatenate %1, %3 in 1 : vector<4x128xbf16>, vector<4x128xbf16> -> vector<4x256xbf16>
    %5 = vector.extract_strided_slice %4 {offsets = [0, 0], sizes = [4, 128], strides = [1, 1]} : vector<4x256xbf16> to vector<4x128xbf16>
    %6 = vector.extract_strided_slice %4 {offsets = [0, 1], sizes = [4, 128], strides = [1, 1]} : vector<4x256xbf16> to vector<4x128xbf16>
    %7 = vector.extract_strided_slice %4 {offsets = [0, 8], sizes = [4, 128], strides = [1, 1]} : vector<4x256xbf16> to vector<4x128xbf16>
    %8 = vector.extract_strided_slice %4 {offsets = [0, 9], sizes = [4, 128], strides = [1, 1]} : vector<4x256xbf16> to vector<4x128xbf16>
    %9 = tpu.concatenate %5, %6, %7, %8 in 0 : vector<4x128xbf16>, vector<4x128xbf16>, vector<4x128xbf16>, vector<4x128xbf16> -> vector<16x128xbf16>
    %c0_5 = arith.constant 0 : index
    %c0_6 = arith.constant 0 : index
    %10 = vector.load %arg4[%c0_5, %c0_6] : memref<24x16xbf16, #tpu.memory_space<vmem>>, vector<24x16xbf16>
    %cst = arith.constant dense<0.000000e+00> : vector<24x128xf32>
    %11 = tpu.matmul %10, %9, %cst {dimension_numbers = #tpu.dot_dimension_numbers<[1], [0], [0], [1], [0, 0, 1, 1], [], []>} : vector<24x16xbf16>, vector<16x128xbf16>, vector<24x128xf32> -> vector<24x128xf32>
    %12 = vector.extract_strided_slice %11 {offsets = [0, 0], sizes = [6, 128], strides = [1, 1]} : vector<24x128xf32> to vector<6x128xf32>
    %13 = vector.extract_strided_slice %11 {offsets = [6, 0], sizes = [6, 128], strides = [1, 1]} : vector<24x128xf32> to vector<6x128xf32>
    %14 = arith.maximumf %12, %13 : vector<6x128xf32>
    %15 = vector.extract_strided_slice %11 {offsets = [12, 0], sizes = [6, 128], strides = [1, 1]} : vector<24x128xf32> to vector<6x128xf32>
    %16 = vector.extract_strided_slice %11 {offsets = [18, 0], sizes = [6, 128], strides = [1, 1]} : vector<24x128xf32> to vector<6x128xf32>
    %17 = arith.maximumf %15, %16 : vector<6x128xf32>
    %18 = arith.maximumf %14, %17 : vector<6x128xf32>
    %c0_7 = arith.constant 0 : index
    %c0_8 = arith.constant 0 : index
    %19 = vector.load %arg5[%c0_7, %c0_8] : memref<6x1xf32, #tpu.memory_space<vmem>>, vector<6x1xf32>
    %20 = vector.broadcast %19 : vector<6x1xf32> to vector<6x128xf32>
    %21 = arith.addf %18, %20 : vector<6x128xf32>
    %22 = arith.truncf %21 : vector<6x128xf32> to vector<6x128xbf16>
    %c0_9 = arith.constant 0 : index
    %c0_10 = arith.constant 0 : index
    %c0_11 = arith.constant 0 : index
    %23 = vector.load %arg6[%c0_9, %c0_10, %c0_11] : memref<1x6x128xbf16, #tpu.memory_space<vmem>>, vector<1x6x128xbf16>
    %24 = vector.shape_cast %23 : vector<1x6x128xbf16> to vector<6x128xbf16>
    %25 = vector.shape_cast %22 : vector<6x128xbf16> to vector<1x6x128xbf16>
    tpu.vector_store %arg6[%c0_9, %c0_10, %c0_11], %25 {strides = array<i32>} : memref<1x6x128xbf16, #tpu.memory_space<vmem>>, vector<1x6x128xbf16>,
    return
  }
  func.func @transform_0(%arg0: i32, %arg1: i32) -> (i32, i32, i32) {
    %c0_i32 = arith.constant 0 : i32
    %c0_i32_0 = arith.constant 0 : i32
    return %arg0, %c0_i32, %arg1 : i32, i32, i32
  }
  func.func @transform_1(%arg0: i32, %arg1: i32) -> (i32, i32, i32) {
    %c1_i32 = arith.constant 1 : i32
    %0 = arith.addi %arg1, %c1_i32 : i32
    %c0_i32 = arith.constant 0 : i32
    %c0_i32_0 = arith.constant 0 : i32
    return %arg0, %c0_i32, %0 : i32, i32, i32
  }
  func.func @transform_2(%arg0: i32, %arg1: i32) -> (i32, i32) {
    %c0_i32 = arith.constant 0 : i32
    %c0_i32_0 = arith.constant 0 : i32
    %c0_i32_1 = arith.constant 0 : i32
    return %c0_i32, %c0_i32_0 : i32, i32
  }
  func.func @transform_3(%arg0: i32, %arg1: i32) -> (i32, i32) {
    %c0_i32 = arith.constant 0 : i32
    %c0_i32_0 = arith.constant 0 : i32
    %c0_i32_1 = arith.constant 0 : i32
    return %c0_i32, %c0_i32_0 : i32, i32
  }
  func.func @transform_4(%arg0: i32, %arg1: i32) -> (i32, i32, i32) {
    %c0_i32 = arith.constant 0 : i32
    %c0_i32_0 = arith.constant 0 : i32
    return %arg0, %c0_i32, %arg1 : i32, i32, i32
  }
}

module attributes {stable_mosaic.version = 11 : i64} {
  func.func @_conv2_stats_kernel(%arg0: i32, %arg1: i32, %arg2: memref<1x6x128xbf16, #tpu.memory_space<vmem>>, %arg3: memref<1x6x128xbf16, #tpu.memory_space<vmem>>, %arg4: memref<3x54xbf16, #tpu.memory_space<vmem>>, %arg5: memref<3x1xf32, #tpu.memory_space<vmem>>, %arg6: memref<1x128xf32, #tpu.memory_space<vmem>>, %arg7: memref<1x3x128xbf16, #tpu.memory_space<vmem>>, %arg8: memref<1x1x3x1xf32, #tpu.memory_space<vmem>>, %arg9: memref<1x1x3x1xf32, #tpu.memory_space<vmem>>) attributes {dimension_semantics = [#tpu.dimension_semantics<parallel>, #tpu.dimension_semantics<parallel>], iteration_bounds = array<i64: 2, 2>, scalar_prefetch = 0 : i64, scratch_operands = 0 : i64, tpu.core_type = #tpu.core_type<tc>, window_params = [{transform_indices = @transform_0, window_bounds = array<i64: 1, 6, 128>}, {transform_indices = @transform_1, window_bounds = array<i64: 1, 6, 128>}, {pipeline_mode = #tpu.pipeline_mode<synchronous>, transform_indices = @transform_2, window_bounds = array<i64: 3, 54>}, {pipeline_mode = #tpu.pipeline_mode<synchronous>, transform_indices = @transform_3, window_bounds = array<i64: 3, 1>}, {transform_indices = @transform_4, window_bounds = array<i64: 1, 128>}, {transform_indices = @transform_5, window_bounds = array<i64: 1, 3, 128>}, {transform_indices = @transform_6, window_bounds = array<i64: 1, 1, 3, 1>}, {transform_indices = @transform_7, window_bounds = array<i64: 1, 1, 3, 1>}]} {
    %c0 = arith.constant 0 : index
    %c0_0 = arith.constant 0 : index
    %c0_1 = arith.constant 0 : index
    %0 = vector.load %arg2[%c0, %c0_0, %c0_1] : memref<1x6x128xbf16, #tpu.memory_space<vmem>>, vector<1x6x128xbf16>
    %1 = vector.shape_cast %0 : vector<1x6x128xbf16> to vector<6x128xbf16>
    %c0_2 = arith.constant 0 : index
    %c0_3 = arith.constant 0 : index
    %c0_4 = arith.constant 0 : index
    %2 = vector.load %arg3[%c0_2, %c0_3, %c0_4] : memref<1x6x128xbf16, #tpu.memory_space<vmem>>, vector<1x6x128xbf16>
    %3 = vector.shape_cast %2 : vector<1x6x128xbf16> to vector<6x128xbf16>
    %4 = tpu.concatenate %1, %3 in 1 : vector<6x128xbf16>, vector<6x128xbf16> -> vector<6x256xbf16>
    %5 = vector.extract_strided_slice %4 {offsets = [0, 0], sizes = [6, 128], strides = [1, 1]} : vector<6x256xbf16> to vector<6x128xbf16>
    %6 = vector.extract_strided_slice %4 {offsets = [0, 1], sizes = [6, 128], strides = [1, 1]} : vector<6x256xbf16> to vector<6x128xbf16>
    %7 = vector.extract_strided_slice %4 {offsets = [0, 2], sizes = [6, 128], strides = [1, 1]} : vector<6x256xbf16> to vector<6x128xbf16>
    %8 = vector.extract_strided_slice %4 {offsets = [0, 8], sizes = [6, 128], strides = [1, 1]} : vector<6x256xbf16> to vector<6x128xbf16>
    %9 = vector.extract_strided_slice %4 {offsets = [0, 9], sizes = [6, 128], strides = [1, 1]} : vector<6x256xbf16> to vector<6x128xbf16>
    %10 = vector.extract_strided_slice %4 {offsets = [0, 10], sizes = [6, 128], strides = [1, 1]} : vector<6x256xbf16> to vector<6x128xbf16>
    %11 = vector.extract_strided_slice %4 {offsets = [0, 16], sizes = [6, 128], strides = [1, 1]} : vector<6x256xbf16> to vector<6x128xbf16>
    %12 = vector.extract_strided_slice %4 {offsets = [0, 17], sizes = [6, 128], strides = [1, 1]} : vector<6x256xbf16> to vector<6x128xbf16>
    %13 = vector.extract_strided_slice %4 {offsets = [0, 18], sizes = [6, 128], strides = [1, 1]} : vector<6x256xbf16> to vector<6x128xbf16>
    %14 = tpu.concatenate %5, %6, %7, %8, %9, %10, %11, %12, %13 in 0 : vector<6x128xbf16>, vector<6x128xbf16>, vector<6x128xbf16>, vector<6x128xbf16>, vector<6x128xbf16>, vector<6x128xbf16>, vector<6x128xbf16>, vector<6x128xbf16>, vector<6x128xbf16> -> vector<54x128xbf16>
    %c0_5 = arith.constant 0 : index
    %c0_6 = arith.constant 0 : index
    %15 = vector.load %arg4[%c0_5, %c0_6] : memref<3x54xbf16, #tpu.memory_space<vmem>>, vector<3x54xbf16>
    %cst = arith.constant dense<0.000000e+00> : vector<3x128xf32>
    %16 = tpu.matmul %15, %14, %cst {dimension_numbers = #tpu.dot_dimension_numbers<[1], [0], [0], [1], [0, 0, 1, 1], [], []>} : vector<3x54xbf16>, vector<54x128xbf16>, vector<3x128xf32> -> vector<3x128xf32>
    %c0_7 = arith.constant 0 : index
    %c0_8 = arith.constant 0 : index
    %17 = vector.load %arg5[%c0_7, %c0_8] : memref<3x1xf32, #tpu.memory_space<vmem>>, vector<3x1xf32>
    %18 = vector.broadcast %17 : vector<3x1xf32> to vector<3x128xf32>
    %19 = arith.addf %16, %18 : vector<3x128xf32>
    %20 = arith.truncf %19 : vector<3x128xf32> to vector<3x128xbf16>
    %c0_9 = arith.constant 0 : index
    %c0_10 = arith.constant 0 : index
    %c0_11 = arith.constant 0 : index
    %21 = vector.load %arg7[%c0_9, %c0_10, %c0_11] : memref<1x3x128xbf16, #tpu.memory_space<vmem>>, vector<1x3x128xbf16>
    %22 = vector.shape_cast %21 : vector<1x3x128xbf16> to vector<3x128xbf16>
    %23 = vector.shape_cast %20 : vector<3x128xbf16> to vector<1x3x128xbf16>
    tpu.vector_store %arg7[%c0_9, %c0_10, %c0_11], %23 {strides = array<i32>} : memref<1x3x128xbf16, #tpu.memory_space<vmem>>, vector<1x3x128xbf16>,
    %c0_12 = arith.constant 0 : index
    %c0_13 = arith.constant 0 : index
    %24 = vector.load %arg6[%c0_12, %c0_13] : memref<1x128xf32, #tpu.memory_space<vmem>>, vector<1x128xf32>
    %25 = vector.broadcast %24 : vector<1x128xf32> to vector<3x128xf32>
    %26 = arith.mulf %19, %25 : vector<3x128xf32>
    %cst_14 = arith.constant dense<0.000000e+00> : vector<3xf32>
    %27 = vector.multi_reduction <add>, %26, %cst_14 [1] : vector<3x128xf32> to vector<3xf32>
    %28 = vector.shape_cast %27 : vector<3xf32> to vector<3x1xf32>
    %c0_15 = arith.constant 0 : index
    %c0_16 = arith.constant 0 : index
    %c0_17 = arith.constant 0 : index
    %c0_18 = arith.constant 0 : index
    %29 = vector.load %arg8[%c0_15, %c0_16, %c0_17, %c0_18] : memref<1x1x3x1xf32, #tpu.memory_space<vmem>>, vector<1x1x3x1xf32>
    %30 = vector.shape_cast %29 : vector<1x1x3x1xf32> to vector<3x1xf32>
    %31 = vector.shape_cast %28 : vector<3x1xf32> to vector<1x1x3x1xf32>
    tpu.vector_store %arg8[%c0_15, %c0_16, %c0_17, %c0_18], %31 {strides = array<i32>} : memref<1x1x3x1xf32, #tpu.memory_space<vmem>>, vector<1x1x3x1xf32>,
    %32 = arith.mulf %26, %26 : vector<3x128xf32>
    %cst_19 = arith.constant dense<0.000000e+00> : vector<3xf32>
    %33 = vector.multi_reduction <add>, %32, %cst_19 [1] : vector<3x128xf32> to vector<3xf32>
    %34 = vector.shape_cast %33 : vector<3xf32> to vector<3x1xf32>
    %c0_20 = arith.constant 0 : index
    %c0_21 = arith.constant 0 : index
    %c0_22 = arith.constant 0 : index
    %c0_23 = arith.constant 0 : index
    %35 = vector.load %arg9[%c0_20, %c0_21, %c0_22, %c0_23] : memref<1x1x3x1xf32, #tpu.memory_space<vmem>>, vector<1x1x3x1xf32>
    %36 = vector.shape_cast %35 : vector<1x1x3x1xf32> to vector<3x1xf32>
    %37 = vector.shape_cast %34 : vector<3x1xf32> to vector<1x1x3x1xf32>
    tpu.vector_store %arg9[%c0_20, %c0_21, %c0_22, %c0_23], %37 {strides = array<i32>} : memref<1x1x3x1xf32, #tpu.memory_space<vmem>>, vector<1x1x3x1xf32>,
    return
  }
  func.func @transform_0(%arg0: i32, %arg1: i32) -> (i32, i32, i32) {
    %c0_i32 = arith.constant 0 : i32
    %c0_i32_0 = arith.constant 0 : i32
    return %arg0, %c0_i32, %arg1 : i32, i32, i32
  }
  func.func @transform_1(%arg0: i32, %arg1: i32) -> (i32, i32, i32) {
    %c1_i32 = arith.constant 1 : i32
    %0 = arith.addi %arg1, %c1_i32 : i32
    %c0_i32 = arith.constant 0 : i32
    %c0_i32_0 = arith.constant 0 : i32
    return %arg0, %c0_i32, %0 : i32, i32, i32
  }
  func.func @transform_2(%arg0: i32, %arg1: i32) -> (i32, i32) {
    %c0_i32 = arith.constant 0 : i32
    %c0_i32_0 = arith.constant 0 : i32
    %c0_i32_1 = arith.constant 0 : i32
    return %c0_i32, %c0_i32_0 : i32, i32
  }
  func.func @transform_3(%arg0: i32, %arg1: i32) -> (i32, i32) {
    %c0_i32 = arith.constant 0 : i32
    %c0_i32_0 = arith.constant 0 : i32
    %c0_i32_1 = arith.constant 0 : i32
    return %c0_i32, %c0_i32_0 : i32, i32
  }
  func.func @transform_4(%arg0: i32, %arg1: i32) -> (i32, i32) {
    %c0_i32 = arith.constant 0 : i32
    %c0_i32_0 = arith.constant 0 : i32
    return %c0_i32, %arg1 : i32, i32
  }
  func.func @transform_5(%arg0: i32, %arg1: i32) -> (i32, i32, i32) {
    %c0_i32 = arith.constant 0 : i32
    %c0_i32_0 = arith.constant 0 : i32
    return %arg0, %c0_i32, %arg1 : i32, i32, i32
  }
  func.func @transform_6(%arg0: i32, %arg1: i32) -> (i32, i32, i32, i32) {
    %c0_i32 = arith.constant 0 : i32
    %c0_i32_0 = arith.constant 0 : i32
    %c0_i32_1 = arith.constant 0 : i32
    return %arg0, %arg1, %c0_i32, %c0_i32_0 : i32, i32, i32, i32
  }
  func.func @transform_7(%arg0: i32, %arg1: i32) -> (i32, i32, i32, i32) {
    %c0_i32 = arith.constant 0 : i32
    %c0_i32_0 = arith.constant 0 : i32
    %c0_i32_1 = arith.constant 0 : i32
    return %arg0, %arg1, %c0_i32, %c0_i32_0 : i32, i32, i32, i32
  }
}

module attributes {stable_mosaic.version = 11 : i64} {
  func.func @_bn_relu_conv3_kernel(%arg0: i32, %arg1: i32, %arg2: memref<1x3x128xbf16, #tpu.memory_space<vmem>>, %arg3: memref<1x3x128xbf16, #tpu.memory_space<vmem>>, %arg4: memref<3x1xf32, #tpu.memory_space<vmem>>, %arg5: memref<3x1xf32, #tpu.memory_space<vmem>>, %arg6: memref<6x27xbf16, #tpu.memory_space<vmem>>, %arg7: memref<6x1xf32, #tpu.memory_space<vmem>>, %arg8: memref<1x6x128xbf16, #tpu.memory_space<vmem>>) attributes {dimension_semantics = [#tpu.dimension_semantics<parallel>, #tpu.dimension_semantics<parallel>], iteration_bounds = array<i64: 2, 1>, scalar_prefetch = 0 : i64, scratch_operands = 0 : i64, tpu.core_type = #tpu.core_type<tc>, window_params = [{transform_indices = @transform_0, window_bounds = array<i64: 1, 3, 128>}, {transform_indices = @transform_1, window_bounds = array<i64: 1, 3, 128>}, {pipeline_mode = #tpu.pipeline_mode<synchronous>, transform_indices = @transform_2, window_bounds = array<i64: 3, 1>}, {pipeline_mode = #tpu.pipeline_mode<synchronous>, transform_indices = @transform_3, window_bounds = array<i64: 3, 1>}, {pipeline_mode = #tpu.pipeline_mode<synchronous>, transform_indices = @transform_4, window_bounds = array<i64: 6, 27>}, {pipeline_mode = #tpu.pipeline_mode<synchronous>, transform_indices = @transform_5, window_bounds = array<i64: 6, 1>}, {transform_indices = @transform_6, window_bounds = array<i64: 1, 6, 128>}]} {
    %c0 = arith.constant 0 : index
    %c0_0 = arith.constant 0 : index
    %c0_1 = arith.constant 0 : index
    %0 = vector.load %arg2[%c0, %c0_0, %c0_1] : memref<1x3x128xbf16, #tpu.memory_space<vmem>>, vector<1x3x128xbf16>
    %1 = vector.shape_cast %0 : vector<1x3x128xbf16> to vector<3x128xbf16>
    %c0_2 = arith.constant 0 : index
    %c0_3 = arith.constant 0 : index
    %c0_4 = arith.constant 0 : index
    %2 = vector.load %arg3[%c0_2, %c0_3, %c0_4] : memref<1x3x128xbf16, #tpu.memory_space<vmem>>, vector<1x3x128xbf16>
    %3 = vector.shape_cast %2 : vector<1x3x128xbf16> to vector<3x128xbf16>
    %4 = tpu.concatenate %1, %3 in 1 : vector<3x128xbf16>, vector<3x128xbf16> -> vector<3x256xbf16>
    %5 = arith.extf %4 : vector<3x256xbf16> to vector<3x256xf32>
    %c0_5 = arith.constant 0 : index
    %c0_6 = arith.constant 0 : index
    %6 = vector.load %arg4[%c0_5, %c0_6] : memref<3x1xf32, #tpu.memory_space<vmem>>, vector<3x1xf32>
    %7 = vector.broadcast %6 : vector<3x1xf32> to vector<3x256xf32>
    %8 = arith.mulf %5, %7 : vector<3x256xf32>
    %c0_7 = arith.constant 0 : index
    %c0_8 = arith.constant 0 : index
    %9 = vector.load %arg5[%c0_7, %c0_8] : memref<3x1xf32, #tpu.memory_space<vmem>>, vector<3x1xf32>
    %10 = vector.broadcast %9 : vector<3x1xf32> to vector<3x256xf32>
    %11 = arith.addf %8, %10 : vector<3x256xf32>
    %cst = arith.constant 0.000000e+00 : f32
    %12 = vector.broadcast %cst : f32 to vector<3x256xf32>
    %13 = arith.maximumf %11, %12 : vector<3x256xf32>
    %14 = arith.truncf %13 : vector<3x256xf32> to vector<3x256xbf16>
    %15 = vector.extract_strided_slice %14 {offsets = [0, 0], sizes = [3, 128], strides = [1, 1]} : vector<3x256xbf16> to vector<3x128xbf16>
    %16 = vector.extract_strided_slice %14 {offsets = [0, 1], sizes = [3, 128], strides = [1, 1]} : vector<3x256xbf16> to vector<3x128xbf16>
    %17 = vector.extract_strided_slice %14 {offsets = [0, 2], sizes = [3, 128], strides = [1, 1]} : vector<3x256xbf16> to vector<3x128xbf16>
    %18 = vector.extract_strided_slice %14 {offsets = [0, 8], sizes = [3, 128], strides = [1, 1]} : vector<3x256xbf16> to vector<3x128xbf16>
    %19 = vector.extract_strided_slice %14 {offsets = [0, 9], sizes = [3, 128], strides = [1, 1]} : vector<3x256xbf16> to vector<3x128xbf16>
    %20 = vector.extract_strided_slice %14 {offsets = [0, 10], sizes = [3, 128], strides = [1, 1]} : vector<3x256xbf16> to vector<3x128xbf16>
    %21 = vector.extract_strided_slice %14 {offsets = [0, 16], sizes = [3, 128], strides = [1, 1]} : vector<3x256xbf16> to vector<3x128xbf16>
    %22 = vector.extract_strided_slice %14 {offsets = [0, 17], sizes = [3, 128], strides = [1, 1]} : vector<3x256xbf16> to vector<3x128xbf16>
    %23 = vector.extract_strided_slice %14 {offsets = [0, 18], sizes = [3, 128], strides = [1, 1]} : vector<3x256xbf16> to vector<3x128xbf16>
    %24 = tpu.concatenate %15, %16, %17, %18, %19, %20, %21, %22, %23 in 0 : vector<3x128xbf16>, vector<3x128xbf16>, vector<3x128xbf16>, vector<3x128xbf16>, vector<3x128xbf16>, vector<3x128xbf16>, vector<3x128xbf16>, vector<3x128xbf16>, vector<3x128xbf16> -> vector<27x128xbf16>
    %c0_9 = arith.constant 0 : index
    %c0_10 = arith.constant 0 : index
    %25 = vector.load %arg6[%c0_9, %c0_10] : memref<6x27xbf16, #tpu.memory_space<vmem>>, vector<6x27xbf16>
    %cst_11 = arith.constant dense<0.000000e+00> : vector<6x128xf32>
    %26 = tpu.matmul %25, %24, %cst_11 {dimension_numbers = #tpu.dot_dimension_numbers<[1], [0], [0], [1], [0, 0, 1, 1], [], []>} : vector<6x27xbf16>, vector<27x128xbf16>, vector<6x128xf32> -> vector<6x128xf32>
    %c0_12 = arith.constant 0 : index
    %c0_13 = arith.constant 0 : index
    %27 = vector.load %arg7[%c0_12, %c0_13] : memref<6x1xf32, #tpu.memory_space<vmem>>, vector<6x1xf32>
    %28 = vector.broadcast %27 : vector<6x1xf32> to vector<6x128xf32>
    %29 = arith.addf %26, %28 : vector<6x128xf32>
    %30 = arith.truncf %29 : vector<6x128xf32> to vector<6x128xbf16>
    %c0_14 = arith.constant 0 : index
    %c0_15 = arith.constant 0 : index
    %c0_16 = arith.constant 0 : index
    %31 = vector.load %arg8[%c0_14, %c0_15, %c0_16] : memref<1x6x128xbf16, #tpu.memory_space<vmem>>, vector<1x6x128xbf16>
    %32 = vector.shape_cast %31 : vector<1x6x128xbf16> to vector<6x128xbf16>
    %33 = vector.shape_cast %30 : vector<6x128xbf16> to vector<1x6x128xbf16>
    tpu.vector_store %arg8[%c0_14, %c0_15, %c0_16], %33 {strides = array<i32>} : memref<1x6x128xbf16, #tpu.memory_space<vmem>>, vector<1x6x128xbf16>,
    return
  }
  func.func @transform_0(%arg0: i32, %arg1: i32) -> (i32, i32, i32) {
    %c0_i32 = arith.constant 0 : i32
    %c0_i32_0 = arith.constant 0 : i32
    return %arg0, %c0_i32, %arg1 : i32, i32, i32
  }
  func.func @transform_1(%arg0: i32, %arg1: i32) -> (i32, i32, i32) {
    %c1_i32 = arith.constant 1 : i32
    %0 = arith.addi %arg1, %c1_i32 : i32
    %c0_i32 = arith.constant 0 : i32
    %c0_i32_0 = arith.constant 0 : i32
    return %arg0, %c0_i32, %0 : i32, i32, i32
  }
  func.func @transform_2(%arg0: i32, %arg1: i32) -> (i32, i32) {
    %c0_i32 = arith.constant 0 : i32
    %c0_i32_0 = arith.constant 0 : i32
    %c0_i32_1 = arith.constant 0 : i32
    return %c0_i32, %c0_i32_0 : i32, i32
  }
  func.func @transform_3(%arg0: i32, %arg1: i32) -> (i32, i32) {
    %c0_i32 = arith.constant 0 : i32
    %c0_i32_0 = arith.constant 0 : i32
    %c0_i32_1 = arith.constant 0 : i32
    return %c0_i32, %c0_i32_0 : i32, i32
  }
  func.func @transform_4(%arg0: i32, %arg1: i32) -> (i32, i32) {
    %c0_i32 = arith.constant 0 : i32
    %c0_i32_0 = arith.constant 0 : i32
    %c0_i32_1 = arith.constant 0 : i32
    return %c0_i32, %c0_i32_0 : i32, i32
  }
  func.func @transform_5(%arg0: i32, %arg1: i32) -> (i32, i32) {
    %c0_i32 = arith.constant 0 : i32
    %c0_i32_0 = arith.constant 0 : i32
    %c0_i32_1 = arith.constant 0 : i32
    return %c0_i32, %c0_i32_0 : i32, i32
  }
  func.func @transform_6(%arg0: i32, %arg1: i32) -> (i32, i32, i32) {
    %c0_i32 = arith.constant 0 : i32
    %c0_i32_0 = arith.constant 0 : i32
    return %arg0, %c0_i32, %arg1 : i32, i32, i32
  }
}

module attributes {stable_mosaic.version = 11 : i64} {
  func.func @_fc1_partial_kernel(%arg0: i32, %arg1: i32, %arg2: memref<2x128xbf16, #tpu.memory_space<vmem>>, %arg3: memref<128x120xbf16, #tpu.memory_space<vmem>>, %arg4: memref<1x2x120xf32, #tpu.memory_space<vmem>>) attributes {dimension_semantics = [#tpu.dimension_semantics<parallel>, #tpu.dimension_semantics<arbitrary>], iteration_bounds = array<i64: 2, 1>, scalar_prefetch = 0 : i64, scratch_operands = 0 : i64, tpu.core_type = #tpu.core_type<tc>, window_params = [{transform_indices = @transform_0, window_bounds = array<i64: 2, 128>}, {transform_indices = @transform_1, window_bounds = array<i64: 128, 120>}, {transform_indices = @transform_2, window_bounds = array<i64: 1, 2, 120>}]} {
    %c0_i32 = arith.constant 0 : i32
    %0 = arith.cmpi eq, %arg1, %c0_i32 : i32
    %1 = arith.extui %0 : i1 to i32
    %c0_i32_0 = arith.constant 0 : i32
    %2 = arith.cmpi ne, %1, %c0_i32_0 : i32
    scf.if %2 {
      %cst_10 = arith.constant 0.000000e+00 : f32
      %12 = vector.broadcast %cst_10 : f32 to vector<2x120xf32>
      %c0_11 = arith.constant 0 : index
      %c0_12 = arith.constant 0 : index
      %c0_13 = arith.constant 0 : index
      %13 = vector.load %arg4[%c0_11, %c0_12, %c0_13] : memref<1x2x120xf32, #tpu.memory_space<vmem>>, vector<1x2x120xf32>
      %14 = vector.shape_cast %13 : vector<1x2x120xf32> to vector<2x120xf32>
      %15 = vector.shape_cast %12 : vector<2x120xf32> to vector<1x2x120xf32>
      tpu.vector_store %arg4[%c0_11, %c0_12, %c0_13], %15 {strides = array<i32>} : memref<1x2x120xf32, #tpu.memory_space<vmem>>, vector<1x2x120xf32>,
    } else {
    }
    %c0 = arith.constant 0 : index
    %c0_1 = arith.constant 0 : index
    %c0_2 = arith.constant 0 : index
    %3 = vector.load %arg4[%c0, %c0_1, %c0_2] : memref<1x2x120xf32, #tpu.memory_space<vmem>>, vector<1x2x120xf32>
    %4 = vector.shape_cast %3 : vector<1x2x120xf32> to vector<2x120xf32>
    %c0_3 = arith.constant 0 : index
    %c0_4 = arith.constant 0 : index
    %5 = vector.load %arg2[%c0_3, %c0_4] : memref<2x128xbf16, #tpu.memory_space<vmem>>, vector<2x128xbf16>
    %c0_5 = arith.constant 0 : index
    %c0_6 = arith.constant 0 : index
    %6 = vector.load %arg3[%c0_5, %c0_6] : memref<128x120xbf16, #tpu.memory_space<vmem>>, vector<128x120xbf16>
    %cst = arith.constant dense<0.000000e+00> : vector<2x120xf32>
    %7 = tpu.matmul %5, %6, %cst {dimension_numbers = #tpu.dot_dimension_numbers<[1], [0], [0], [1], [0, 0, 1, 1], [], []>} : vector<2x128xbf16>, vector<128x120xbf16>, vector<2x120xf32> -> vector<2x120xf32>
    %8 = arith.addf %4, %7 : vector<2x120xf32>
    %c0_7 = arith.constant 0 : index
    %c0_8 = arith.constant 0 : index
    %c0_9 = arith.constant 0 : index
    %9 = vector.load %arg4[%c0_7, %c0_8, %c0_9] : memref<1x2x120xf32, #tpu.memory_space<vmem>>, vector<1x2x120xf32>
    %10 = vector.shape_cast %9 : vector<1x2x120xf32> to vector<2x120xf32>
    %11 = vector.shape_cast %8 : vector<2x120xf32> to vector<1x2x120xf32>
    tpu.vector_store %arg4[%c0_7, %c0_8, %c0_9], %11 {strides = array<i32>} : memref<1x2x120xf32, #tpu.memory_space<vmem>>, vector<1x2x120xf32>,
    return
  }
  func.func @transform_0(%arg0: i32, %arg1: i32) -> (i32, i32) {
    %c1_i32 = arith.constant 1 : i32
    %0 = arith.muli %arg0, %c1_i32 : i32
    %1 = arith.addi %0, %arg1 : i32
    %c0_i32 = arith.constant 0 : i32
    %c0_i32_0 = arith.constant 0 : i32
    return %c0_i32, %1 : i32, i32
  }
  func.func @transform_1(%arg0: i32, %arg1: i32) -> (i32, i32) {
    %c1_i32 = arith.constant 1 : i32
    %0 = arith.muli %arg0, %c1_i32 : i32
    %1 = arith.addi %0, %arg1 : i32
    %c0_i32 = arith.constant 0 : i32
    %c0_i32_0 = arith.constant 0 : i32
    return %1, %c0_i32 : i32, i32
  }
  func.func @transform_2(%arg0: i32, %arg1: i32) -> (i32, i32, i32) {
    %c0_i32 = arith.constant 0 : i32
    %c0_i32_0 = arith.constant 0 : i32
    %c0_i32_1 = arith.constant 0 : i32
    return %arg0, %c0_i32, %c0_i32_0 : i32, i32, i32
  }
}

</mosaic_0001>

<llo_original>
// kernel: squeeze.0
$region0: #{squeeze.0}
  %s0 = inlined_call_operand.vmem [shape: bf16[2,1,16,16], index: 0, kind: input, shape index: {}]
  %s1 = inlined_call_operand.vmem [shape: bf16[2,8,2,8,2], index: 1, kind: output, shape index: {}]
  $region1: #{squeeze.0} parent=0
    #allocation0 [shape = 'u8[131072]{0}', space=vmem, size = 0x20000, scoped, tag = 'scoped mem for output reshape']
    #allocation1 [shape = 'u8[16384]{0}', space=vmem, size = 0x4000, scoped, tag = 'scoped mem for input reshape']
    %s3 = smul.u32 4, 2
    %s4 = sshllo.u32 0, %s3
    %s5 = smul.addr 4, 3
    %s6 = scalar_lea.vmem %s0, %s5
    %s7 = sshrl.u32 %s4, 1
    %s8 = sor.u32 %s4, %s7
    %s9 = sand.u32 %s8, 85
    %s10 = sshrl.u32 %s9, 1
    %s11 = sor.u32 %s9, %s10
    %s12 = sand.u32 51, %s11
    %s13 = sshrl.u32 %s12, 2
    %s14 = sor.u32 %s12, %s13
    %s15 = sand.u32 15, %s14
    %v16 = vld [vmem:[%s6] sm:%s15]
    %v17 = vunpack.c.l.bf16 %v16
    %v18 = vunpack.c.h.bf16 %v16
    %s19 = scalar_lea.vmem [#allocation1], 24
    %20 = vst [vmem:[%s19] sm:%s4] %v17
    %s21 = smul.addr 4, 2
    %s22 = scalar_lea.vmem %s0, %s21
    %s23 = sshrl.u32 %s4, 1
    %s24 = sor.u32 %s4, %s23
    %s25 = sand.u32 %s24, 85
    %s26 = sshrl.u32 %s25, 1
    %s27 = sor.u32 %s25, %s26
    %s28 = sand.u32 51, %s27
    %s29 = sshrl.u32 %s28, 2
    %s30 = sor.u32 %s28, %s29
    %s31 = sand.u32 15, %s30
    %v32 = vld [vmem:[%s22] sm:%s31]
    %v33 = vunpack.c.l.bf16 %v32
    %v34 = vunpack.c.h.bf16 %v32
    %s35 = scalar_lea.vmem [#allocation1], 16
    %36 = vst [vmem:[%s35] sm:%s4] %v33
    %s37 = scalar_lea.vmem %s0, 4
    %s38 = sshrl.u32 %s4, 1
    %s39 = sor.u32 %s4, %s38
    %s40 = sand.u32 %s39, 85
    %s41 = sshrl.u32 %s40, 1
    %s42 = sor.u32 %s40, %s41
    %s43 = sand.u32 51, %s42
    %s44 = sshrl.u32 %s43, 2
    %s45 = sor.u32 %s43, %s44
    %s46 = sand.u32 15, %s45
    %v47 = vld [vmem:[%s37] sm:%s46]
    %v48 = vunpack.c.l.bf16 %v47
    %v49 = vunpack.c.h.bf16 %v47
    %s50 = scalar_lea.vmem [#allocation1], 8
    %51 = vst [vmem:[%s50] sm:%s4] %v48
    %s52 = sshrl.u32 %s4, 1
    %s53 = sor.u32 %s4, %s52
    %s54 = sand.u32 %s53, 85
    %s55 = sshrl.u32 %s54, 1
    %s56 = sor.u32 %s54, %s55
    %s57 = sand.u32 51, %s56
    %s58 = sshrl.u32 %s57, 2
    %s59 = sor.u32 %s57, %s58
    %s60 = sand.u32 15, %s59
    %v61 = vld [vmem:[%s0] sm:%s60]
    %v62 = vunpack.c.l.bf16 %v61
    %v63 = vunpack.c.h.bf16 %v61
    %64 = vst [vmem:[#allocation1] sm:%s4] %v62
    %v65 = vld [vmem:[#allocation1] sm:$0xff]
    %vm66 = vcmask 15360
    %67 = vst.msk [vmem:[#allocation0] ss:$8 sm:$0xf] %vm66, %v65
    %68 = vst.msk [vmem:[#allocation0] ss:$8 sm:$0xf0] %vm66, %v65
    %s69 = scalar_lea.vmem [#allocation1], 8
    %v70 = vld [vmem:[%s69] sm:$0xff]
    %vm71 = vcmask 15360
    %s72 = scalar_lea.vmem [#allocation0], 64
    %73 = vst.msk [vmem:[%s72] ss:$8 sm:$0xf] %vm71, %v70
    %s74 = scalar_lea.vmem [#allocation0], 64
    %75 = vst.msk [vmem:[%s74] ss:$8 sm:$0xf0] %vm71, %v70
    %s76 = scalar_lea.vmem [#allocation1], 16
    %v77 = vld [vmem:[%s76] sm:$0xff]
    %vm78 = vcmask 15360
    %s79 = scalar_lea.vmem [#allocation0], 128
    %80 = vst.msk [vmem:[%s79] ss:$8 sm:$0xf] %vm78, %v77
    %s81 = scalar_lea.vmem [#allocation0], 128
    %82 = vst.msk [vmem:[%s81] ss:$8 sm:$0xf0] %vm78, %v77
    %s83 = scalar_lea.vmem [#allocation1], 24
    %v84 = vld [vmem:[%s83] sm:$0xff]
    %vm85 = vcmask 15360
    %s86 = scalar_lea.vmem [#allocation0], 192
    %87 = vst.msk [vmem:[%s86] ss:$8 sm:$0xf] %vm85, %v84
    %s88 = scalar_lea.vmem [#allocation0], 192
    %89 = vst.msk [vmem:[%s88] ss:$8 sm:$0xf0] %vm85, %v84
    %v90 = vld [vmem:[#allocation1] sm:$0xff]
    %91 = vrot.lane.b32.xlu0 %v90, 126
    %v92 = vpop.permute.xlu0 %91
    %vm93 = vcmask 15360
    %s94 = scalar_lea.vmem [#allocation0], 1
    %95 = vst.msk [vmem:[%s94] ss:$8 sm:$0xf] %vm93, %v92
    %s96 = scalar_lea.vmem [#allocation0], 1
    %97 = vst.msk [vmem:[%s96] ss:$8 sm:$0xf0] %vm93, %v92
    %s98 = scalar_lea.vmem [#allocation1], 8
    %v99 = vld [vmem:[%s98] sm:$0xff]
    %100 = vrot.lane.b32.xlu0 %v99, 126
    %v101 = vpop.permute.xlu0 %100
    %vm102 = vcmask 15360
    %s103 = scalar_lea.vmem [#allocation0], 65
    %104 = vst.msk [vmem:[%s103] ss:$8 sm:$0xf] %vm102, %v101
    %s105 = scalar_lea.vmem [#allocation0], 65
    %106 = vst.msk [vmem:[%s105] ss:$8 sm:$0xf0] %vm102, %v101
    %s107 = scalar_lea.vmem [#allocation1], 16
    %v108 = vld [vmem:[%s107] sm:$0xff]
    %109 = vrot.lane.b32.xlu0 %v108, 126
    %v110 = vpop.permute.xlu0 %109
    %vm111 = vcmask 15360
    %s112 = scalar_lea.vmem [#allocation0], 129
    %113 = vst.msk [vmem:[%s112] ss:$8 sm:$0xf] %vm111, %v110
    %s114 = scalar_lea.vmem [#allocation0], 129
    %115 = vst.msk [vmem:[%s114] ss:$8 sm:$0xf0] %vm111, %v110
    %s116 = scalar_lea.vmem [#allocation1], 24
    %v117 = vld [vmem:[%s116] sm:$0xff]
    %118 = vrot.lane.b32.xlu0 %v117, 126
    %v119 = vpop.permute.xlu0 %118
    %vm120 = vcmask 15360
    %s121 = scalar_lea.vmem [#allocation0], 193
    %122 = vst.msk [vmem:[%s121] ss:$8 sm:$0xf] %vm120, %v119
    %s123 = scalar_lea.vmem [#allocation0], 193
    %124 = vst.msk [vmem:[%s123] ss:$8 sm:$0xf0] %vm120, %v119
    %v125 = vld [vmem:[#allocation1] sm:$0xff]
    %126 = vrot.lane.b32.xlu0 %v125, 124
    %v127 = vpop.permute.xlu0 %126
    %vm128 = vcmask 15360
    %s129 = scalar_lea.vmem [#allocation0], 2
    %130 = vst.msk [vmem:[%s129] ss:$8 sm:$0xf] %vm128, %v127
    %s131 = scalar_lea.vmem [#allocation0], 2
    %132 = vst.msk [vmem:[%s131] ss:$8 sm:$0xf0] %vm128, %v127
    %s133 = scalar_lea.vmem [#allocation1], 8
    %v134 = vld [vmem:[%s133] sm:$0xff]
    %135 = vrot.lane.b32.xlu0 %v134, 124
    %v136 = vpop.permute.xlu0 %135
    %vm137 = vcmask 15360
    %s138 = scalar_lea.vmem [#allocation0], 66
    %139 = vst.msk [vmem:[%s138] ss:$8 sm:$0xf] %vm137, %v136
    %s140 = scalar_lea.vmem [#allocation0], 66
    %141 = vst.msk [vmem:[%s140] ss:$8 sm:$0xf0] %vm137, %v136
    %s142 = scalar_lea.vmem [#allocation1], 16
    %v143 = vld [vmem:[%s142] sm:$0xff]
    %144 = vrot.lane.b32.xlu0 %v143, 124
    %v145 = vpop.permute.xlu0 %144
    %vm146 = vcmask 15360
    %s147 = scalar_lea.vmem [#allocation0], 130
    %148 = vst.msk [vmem:[%s147] ss:$8 sm:$0xf] %vm146, %v145
    %s149 = scalar_lea.vmem [#allocation0], 130
    %150 = vst.msk [vmem:[%s149] ss:$8 sm:$0xf0] %vm146, %v145
    %s151 = scalar_lea.vmem [#allocation1], 24
    %v152 = vld [vmem:[%s151] sm:$0xff]
    %153 = vrot.lane.b32.xlu0 %v152, 124
    %v154 = vpop.permute.xlu0 %153
    %vm155 = vcmask 15360
    %s156 = scalar_lea.vmem [#allocation0], 194
    %157 = vst.msk [vmem:[%s156] ss:$8 sm:$0xf] %vm155, %v154
    %s158 = scalar_lea.vmem [#allocation0], 194
    %159 = vst.msk [vmem:[%s158] ss:$8 sm:$0xf0] %vm155, %v154
    %v160 = vld [vmem:[#allocation1] sm:$0xff]
    %161 = vrot.lane.b32.xlu0 %v160, 122
    %v162 = vpop.permute.xlu0 %161
    %vm163 = vcmask 15360
    %s164 = scalar_lea.vmem [#allocation0], 3
    %165 = vst.msk [vmem:[%s164] ss:$8 sm:$0xf] %vm163, %v162
    %s166 = scalar_lea.vmem [#allocation0], 3
    %167 = vst.msk [vmem:[%s166] ss:$8 sm:$0xf0] %vm163, %v162
    %s168 = scalar_lea.vmem [#allocation1], 8
    %v169 = vld [vmem:[%s168] sm:$0xff]
    %170 = vrot.lane.b32.xlu0 %v169, 122
    %v171 = vpop.permute.xlu0 %170
    %vm172 = vcmask 15360
    %s173 = scalar_lea.vmem [#allocation0], 67
    %174 = vst.msk [vmem:[%s173] ss:$8 sm:$0xf] %vm172, %v171
    %s175 = scalar_lea.vmem [#allocation0], 67
    %176 = vst.msk [vmem:[%s175] ss:$8 sm:$0xf0] %vm172, %v171
    %s177 = scalar_lea.vmem [#allocation1], 16
    %v178 = vld [vmem:[%s177] sm:$0xff]
    %179 = vrot.lane.b32.xlu0 %v178, 122
    %v180 = vpop.permute.xlu0 %179
    %vm181 = vcmask 15360
    %s182 = scalar_lea.vmem [#allocation0], 131
    %183 = vst.msk [vmem:[%s182] ss:$8 sm:$0xf] %vm181, %v180
    %s184 = scalar_lea.vmem [#allocation0], 131
    %185 = vst.msk [vmem:[%s184] ss:$8 sm:$0xf0] %vm181, %v180
    %s186 = scalar_lea.vmem [#allocation1], 24
    %v187 = vld [vmem:[%s186] sm:$0xff]
    %188 = vrot.lane.b32.xlu0 %v187, 122
    %v189 = vpop.permute.xlu0 %188
    %vm190 = vcmask 15360
    %s191 = scalar_lea.vmem [#allocation0], 195
    %192 = vst.msk [vmem:[%s191] ss:$8 sm:$0xf] %vm190, %v189
    %s193 = scalar_lea.vmem [#allocation0], 195
    %194 = vst.msk [vmem:[%s193] ss:$8 sm:$0xf0] %vm190, %v189
    %v195 = vld [vmem:[#allocation1] sm:$0xff]
    %196 = vrot.lane.b32.xlu0 %v195, 120
    %v197 = vpop.permute.xlu0 %196
    %vm198 = vcmask 15360
    %s199 = scalar_lea.vmem [#allocation0], 4
    %200 = vst.msk [vmem:[%s199] ss:$8 sm:$0xf] %vm198, %v197
    %s201 = scalar_lea.vmem [#allocation0], 4
    %202 = vst.msk [vmem:[%s201] ss:$8 sm:$0xf0] %vm198, %v197
    %s203 = scalar_lea.vmem [#allocation1], 8
    %v204 = vld [vmem:[%s203] sm:$0xff]
    %205 = vrot.lane.b32.xlu0 %v204, 120
    %v206 = vpop.permute.xlu0 %205
    %vm207 = vcmask 15360
    %s208 = scalar_lea.vmem [#allocation0], 68
    %209 = vst.msk [vmem:[%s208] ss:$8 sm:$0xf] %vm207, %v206
    %s210 = scalar_lea.vmem [#allocation0], 68
    %211 = vst.msk [vmem:[%s210] ss:$8 sm:$0xf0] %vm207, %v206
    %s212 = scalar_lea.vmem [#allocation1], 16
    %v213 = vld [vmem:[%s212] sm:$0xff]
    %214 = vrot.lane.b32.xlu0 %v213, 120
    %v215 = vpop.permute.xlu0 %214
    %vm216 = vcmask 15360
    %s217 = scalar_lea.vmem [#allocation0], 132
    %218 = vst.msk [vmem:[%s217] ss:$8 sm:$0xf] %vm216, %v215
    %s219 = scalar_lea.vmem [#allocation0], 132
    %220 = vst.msk [vmem:[%s219] ss:$8 sm:$0xf0] %vm216, %v215
    %s221 = scalar_lea.vmem [#allocation1], 24
    %v222 = vld [vmem:[%s221] sm:$0xff]
    %223 = vrot.lane.b32.xlu0 %v222, 120
    %v224 = vpop.permute.xlu0 %223
    %vm225 = vcmask 15360
    %s226 = scalar_lea.vmem [#allocation0], 196
    %227 = vst.msk [vmem:[%s226] ss:$8 sm:$0xf] %vm225, %v224
    %s228 = scalar_lea.vmem [#allocation0], 196
    %229 = vst.msk [vmem:[%s228] ss:$8 sm:$0xf0] %vm225, %v224
    %v230 = vld [vmem:[#allocation1] sm:$0xff]
    %231 = vrot.lane.b32.xlu0 %v230, 118
    %v232 = vpop.permute.xlu0 %231
    %vm233 = vcmask 15360
    %s234 = scalar_lea.vmem [#allocation0], 5
    %235 = vst.msk [vmem:[%s234] ss:$8 sm:$0xf] %vm233, %v232
    %s236 = scalar_lea.vmem [#allocation0], 5
    %237 = vst.msk [vmem:[%s236] ss:$8 sm:$0xf0] %vm233, %v232
    %s238 = scalar_lea.vmem [#allocation1], 8
    %v239 = vld [vmem:[%s238] sm:$0xff]
    %240 = vrot.lane.b32.xlu0 %v239, 118
    %v241 = vpop.permute.xlu0 %240
    %vm242 = vcmask 15360
    %s243 = scalar_lea.vmem [#allocation0], 69
    %244 = vst.msk [vmem:[%s243] ss:$8 sm:$0xf] %vm242, %v241
    %s245 = scalar_lea.vmem [#allocation0], 69
    %246 = vst.msk [vmem:[%s245] ss:$8 sm:$0xf0] %vm242, %v241
    %s247 = scalar_lea.vmem [#allocation1], 16
    %v248 = vld [vmem:[%s247] sm:$0xff]
    %249 = vrot.lane.b32.xlu0 %v248, 118
    %v250 = vpop.permute.xlu0 %249
    %vm251 = vcmask 15360
    %s252 = scalar_lea.vmem [#allocation0], 133
    %253 = vst.msk [vmem:[%s252] ss:$8 sm:$0xf] %vm251, %v250
    %s254 = scalar_lea.vmem [#allocation0], 133
    %255 = vst.msk [vmem:[%s254] ss:$8 sm:$0xf0] %vm251, %v250
    %s256 = scalar_lea.vmem [#allocation1], 24
    %v257 = vld [vmem:[%s256] sm:$0xff]
    %258 = vrot.lane.b32.xlu0 %v257, 118
    %v259 = vpop.permute.xlu0 %258
    %vm260 = vcmask 15360
    %s261 = scalar_lea.vmem [#allocation0], 197
    %262 = vst.msk [vmem:[%s261] ss:$8 sm:$0xf] %vm260, %v259
    %s263 = scalar_lea.vmem [#allocation0], 197
    %264 = vst.msk [vmem:[%s263] ss:$8 sm:$0xf0] %vm260, %v259
    %v265 = vld [vmem:[#allocation1] sm:$0xff]
    %266 = vrot.lane.b32.xlu0 %v265, 116
    %v267 = vpop.permute.xlu0 %266
    %vm268 = vcmask 15360
    %s269 = scalar_lea.vmem [#allocation0], 6
    %270 = vst.msk [vmem:[%s269] ss:$8 sm:$0xf] %vm268, %v267
    %s271 = scalar_lea.vmem [#allocation0], 6
    %272 = vst.msk [vmem:[%s271] ss:$8 sm:$0xf0] %vm268, %v267
    %s273 = scalar_lea.vmem [#allocation1], 8
    %v274 = vld [vmem:[%s273] sm:$0xff]
    %275 = vrot.lane.b32.xlu0 %v274, 116
    %v276 = vpop.permute.xlu0 %275
    %vm277 = vcmask 15360
    %s278 = scalar_lea.vmem [#allocation0], 70
    %279 = vst.msk [vmem:[%s278] ss:$8 sm:$0xf] %vm277, %v276
    %s280 = scalar_lea.vmem [#allocation0], 70
    %281 = vst.msk [vmem:[%s280] ss:$8 sm:$0xf0] %vm277, %v276
    %s282 = scalar_lea.vmem [#allocation1], 16
    %v283 = vld [vmem:[%s282] sm:$0xff]
    %284 = vrot.lane.b32.xlu0 %v283, 116
    %v285 = vpop.permute.xlu0 %284
    %vm286 = vcmask 15360
    %s287 = scalar_lea.vmem [#allocation0], 134
    %288 = vst.msk [vmem:[%s287] ss:$8 sm:$0xf] %vm286, %v285
    %s289 = scalar_lea.vmem [#allocation0], 134
    %290 = vst.msk [vmem:[%s289] ss:$8 sm:$0xf0] %vm286, %v285
    %s291 = scalar_lea.vmem [#allocation1], 24
    %v292 = vld [vmem:[%s291] sm:$0xff]
    %293 = vrot.lane.b32.xlu0 %v292, 116
    %v294 = vpop.permute.xlu0 %293
    %vm295 = vcmask 15360
    %s296 = scalar_lea.vmem [#allocation0], 198
    %297 = vst.msk [vmem:[%s296] ss:$8 sm:$0xf] %vm295, %v294
    %s298 = scalar_lea.vmem [#allocation0], 198
    %299 = vst.msk [vmem:[%s298] ss:$8 sm:$0xf0] %vm295, %v294
    %v300 = vld [vmem:[#allocation1] sm:$0xff]
    %301 = vrot.lane.b32.xlu0 %v300, 114
    %v302 = vpop.permute.xlu0 %301
    %vm303 = vcmask 15360
    %s304 = scalar_lea.vmem [#allocation0], 7
    %305 = vst.msk [vmem:[%s304] ss:$8 sm:$0xf] %vm303, %v302
    %s306 = scalar_lea.vmem [#allocation0], 7
    %307 = vst.msk [vmem:[%s306] ss:$8 sm:$0xf0] %vm303, %v302
    %s308 = scalar_lea.vmem [#allocation1], 8
    %v309 = vld [vmem:[%s308] sm:$0xff]
    %310 = vrot.lane.b32.xlu0 %v309, 114
    %v311 = vpop.permute.xlu0 %310
    %vm312 = vcmask 15360
    %s313 = scalar_lea.vmem [#allocation0], 71
    %314 = vst.msk [vmem:[%s313] ss:$8 sm:$0xf] %vm312, %v311
    %s315 = scalar_lea.vmem [#allocation0], 71
    %316 = vst.msk [vmem:[%s315] ss:$8 sm:$0xf0] %vm312, %v311
    %s317 = scalar_lea.vmem [#allocation1], 16
    %v318 = vld [vmem:[%s317] sm:$0xff]
    %319 = vrot.lane.b32.xlu0 %v318, 114
    %v320 = vpop.permute.xlu0 %319
    %vm321 = vcmask 15360
    %s322 = scalar_lea.vmem [#allocation0], 135
    %323 = vst.msk [vmem:[%s322] ss:$8 sm:$0xf] %vm321, %v320
    %s324 = scalar_lea.vmem [#allocation0], 135
    %325 = vst.msk [vmem:[%s324] ss:$8 sm:$0xf0] %vm321, %v320
    %s326 = scalar_lea.vmem [#allocation1], 24
    %v327 = vld [vmem:[%s326] sm:$0xff]
    %328 = vrot.lane.b32.xlu0 %v327, 114
    %v329 = vpop.permute.xlu0 %328
    %vm330 = vcmask 15360
    %s331 = scalar_lea.vmem [#allocation0], 199
    %332 = vst.msk [vmem:[%s331] ss:$8 sm:$0xf] %vm330, %v329
    %s333 = scalar_lea.vmem [#allocation0], 199
    %334 = vst.msk [vmem:[%s333] ss:$8 sm:$0xf0] %vm330, %v329
    %s336 = smul.u32 4, 2
    %s337 = sshllo.u32 0, %s336
    %s338 = sshrl.u32 %s336, 1
    %v339 = vld [vmem:[#allocation0] sm:%s337]
    %v340 = vpack.c.bf16 0.0, %v339
    %s341 = sshllo.u32 0, %s338
    %342 = vst [vmem:[%s1] sm:%s341] %v340
    %s343 = scalar_lea.vmem [#allocation0], 8
    %v344 = vld [vmem:[%s343] sm:%s337]
    %v345 = vpack.c.bf16 0.0, %v344
    %s346 = sshllo.u32 0, %s338
    %s347 = scalar_lea.vmem %s1, 4
    %348 = vst [vmem:[%s347] sm:%s346] %v345
    %s349 = scalar_lea.vmem [#allocation0], 16
    %v350 = vld [vmem:[%s349] sm:%s337]
    %v351 = vpack.c.bf16 0.0, %v350
    %s352 = sshllo.u32 0, %s338
    %s353 = smul.addr 4, 2
    %s354 = scalar_lea.vmem %s1, %s353
    %355 = vst [vmem:[%s354] sm:%s352] %v351
    %s356 = scalar_lea.vmem [#allocation0], 24
    %v357 = vld [vmem:[%s356] sm:%s337]
    %v358 = vpack.c.bf16 0.0, %v357
    %s359 = sshllo.u32 0, %s338
    %s360 = smul.addr 4, 3
    %s361 = scalar_lea.vmem %s1, %s360
    %362 = vst [vmem:[%s361] sm:%s359] %v358
    %s363 = scalar_lea.vmem [#allocation0], 32
    %v364 = vld [vmem:[%s363] sm:%s337]
    %v365 = vpack.c.bf16 0.0, %v364
    %s366 = sshllo.u32 0, %s338
    %s367 = smul.addr 4, 4
    %s368 = scalar_lea.vmem %s1, %s367
    %369 = vst [vmem:[%s368] sm:%s366] %v365
    %s370 = scalar_lea.vmem [#allocation0], 40
    %v371 = vld [vmem:[%s370] sm:%s337]
    %v372 = vpack.c.bf16 0.0, %v371
    %s373 = sshllo.u32 0, %s338
    %s374 = smul.addr 4, 5
    %s375 = scalar_lea.vmem %s1, %s374
    %376 = vst [vmem:[%s375] sm:%s373] %v372
    %s377 = scalar_lea.vmem [#allocation0], 48
    %v378 = vld [vmem:[%s377] sm:%s337]
    %v379 = vpack.c.bf16 0.0, %v378
    %s380 = sshllo.u32 0, %s338
    %s381 = smul.addr 4, 6
    %s382 = scalar_lea.vmem %s1, %s381
    %383 = vst [vmem:[%s382] sm:%s380] %v379
    %s384 = scalar_lea.vmem [#allocation0], 56
    %v385 = vld [vmem:[%s384] sm:%s337]
    %v386 = vpack.c.bf16 0.0, %v385
    %s387 = sshllo.u32 0, %s338
    %s388 = smul.addr 4, 7
    %s389 = scalar_lea.vmem %s1, %s388
    %390 = vst [vmem:[%s389] sm:%s387] %v386
    %s391 = scalar_lea.vmem [#allocation0], 64
    %v392 = vld [vmem:[%s391] sm:%s337]
    %v393 = vpack.c.bf16 0.0, %v392
    %s394 = sshllo.u32 0, %s338
    %s395 = smul.addr 4, 8
    %s396 = scalar_lea.vmem %s1, %s395
    %397 = vst [vmem:[%s396] sm:%s394] %v393
    %s398 = scalar_lea.vmem [#allocation0], 72
    %v399 = vld [vmem:[%s398] sm:%s337]
    %v400 = vpack.c.bf16 0.0, %v399
    %s401 = sshllo.u32 0, %s338
    %s402 = smul.addr 4, 9
    %s403 = scalar_lea.vmem %s1, %s402
    %404 = vst [vmem:[%s403] sm:%s401] %v400
    %s405 = scalar_lea.vmem [#allocation0], 80
    %v406 = vld [vmem:[%s405] sm:%s337]
    %v407 = vpack.c.bf16 0.0, %v406
    %s408 = sshllo.u32 0, %s338
    %s409 = smul.addr 4, 10
    %s410 = scalar_lea.vmem %s1, %s409
    %411 = vst [vmem:[%s410] sm:%s408] %v407
    %s412 = scalar_lea.vmem [#allocation0], 88
    %v413 = vld [vmem:[%s412] sm:%s337]
    %v414 = vpack.c.bf16 0.0, %v413
    %s415 = sshllo.u32 0, %s338
    %s416 = smul.addr 4, 11
    %s417 = scalar_lea.vmem %s1, %s416
    %418 = vst [vmem:[%s417] sm:%s415] %v414
    %s419 = scalar_lea.vmem [#allocation0], 96
    %v420 = vld [vmem:[%s419] sm:%s337]
    %v421 = vpack.c.bf16 0.0, %v420
    %s422 = sshllo.u32 0, %s338
    %s423 = smul.addr 4, 12
    %s424 = scalar_lea.vmem %s1, %s423
    %425 = vst [vmem:[%s424] sm:%s422] %v421
    %s426 = scalar_lea.vmem [#allocation0], 104
    %v427 = vld [vmem:[%s426] sm:%s337]
    %v428 = vpack.c.bf16 0.0, %v427
    %s429 = sshllo.u32 0, %s338
    %s430 = smul.addr 4, 13
    %s431 = scalar_lea.vmem %s1, %s430
    %432 = vst [vmem:[%s431] sm:%s429] %v428
    %s433 = scalar_lea.vmem [#allocation0], 112
    %v434 = vld [vmem:[%s433] sm:%s337]
    %v435 = vpack.c.bf16 0.0, %v434
    %s436 = sshllo.u32 0, %s338
    %s437 = smul.addr 4, 14
    %s438 = scalar_lea.vmem %s1, %s437
    %439 = vst [vmem:[%s438] sm:%s436] %v435
    %s440 = scalar_lea.vmem [#allocation0], 120
    %v441 = vld [vmem:[%s440] sm:%s337]
    %v442 = vpack.c.bf16 0.0, %v441
    %s443 = sshllo.u32 0, %s338
    %s444 = smul.addr 4, 15
    %s445 = scalar_lea.vmem %s1, %s444
    %446 = vst [vmem:[%s445] sm:%s443] %v442
    %s447 = scalar_lea.vmem [#allocation0], 128
    %v448 = vld [vmem:[%s447] sm:%s337]
    %v449 = vpack.c.bf16 0.0, %v448
    %s450 = sshllo.u32 0, %s338
    %s451 = smul.addr 4, 16
    %s452 = scalar_lea.vmem %s1, %s451
    %453 = vst [vmem:[%s452] sm:%s450] %v449
    %s454 = scalar_lea.vmem [#allocation0], 136
    %v455 = vld [vmem:[%s454] sm:%s337]
    %v456 = vpack.c.bf16 0.0, %v455
    %s457 = sshllo.u32 0, %s338
    %s458 = smul.addr 4, 17
    %s459 = scalar_lea.vmem %s1, %s458
    %460 = vst [vmem:[%s459] sm:%s457] %v456
    %s461 = scalar_lea.vmem [#allocation0], 144
    %v462 = vld [vmem:[%s461] sm:%s337]
    %v463 = vpack.c.bf16 0.0, %v462
    %s464 = sshllo.u32 0, %s338
    %s465 = smul.addr 4, 18
    %s466 = scalar_lea.vmem %s1, %s465
    %467 = vst [vmem:[%s466] sm:%s464] %v463
    %s468 = scalar_lea.vmem [#allocation0], 152
    %v469 = vld [vmem:[%s468] sm:%s337]
    %v470 = vpack.c.bf16 0.0, %v469
    %s471 = sshllo.u32 0, %s338
    %s472 = smul.addr 4, 19
    %s473 = scalar_lea.vmem %s1, %s472
    %474 = vst [vmem:[%s473] sm:%s471] %v470
    %s475 = scalar_lea.vmem [#allocation0], 160
    %v476 = vld [vmem:[%s475] sm:%s337]
    %v477 = vpack.c.bf16 0.0, %v476
    %s478 = sshllo.u32 0, %s338
    %s479 = smul.addr 4, 20
    %s480 = scalar_lea.vmem %s1, %s479
    %481 = vst [vmem:[%s480] sm:%s478] %v477
    %s482 = scalar_lea.vmem [#allocation0], 168
    %v483 = vld [vmem:[%s482] sm:%s337]
    %v484 = vpack.c.bf16 0.0, %v483
    %s485 = sshllo.u32 0, %s338
    %s486 = smul.addr 4, 21
    %s487 = scalar_lea.vmem %s1, %s486
    %488 = vst [vmem:[%s487] sm:%s485] %v484
    %s489 = scalar_lea.vmem [#allocation0], 176
    %v490 = vld [vmem:[%s489] sm:%s337]
    %v491 = vpack.c.bf16 0.0, %v490
    %s492 = sshllo.u32 0, %s338
    %s493 = smul.addr 4, 22
    %s494 = scalar_lea.vmem %s1, %s493
    %495 = vst [vmem:[%s494] sm:%s492] %v491
    %s496 = scalar_lea.vmem [#allocation0], 184
    %v497 = vld [vmem:[%s496] sm:%s337]
    %v498 = vpack.c.bf16 0.0, %v497
    %s499 = sshllo.u32 0, %s338
    %s500 = smul.addr 4, 23
    %s501 = scalar_lea.vmem %s1, %s500
    %502 = vst [vmem:[%s501] sm:%s499] %v498
    %s503 = scalar_lea.vmem [#allocation0], 192
    %v504 = vld [vmem:[%s503] sm:%s337]
    %v505 = vpack.c.bf16 0.0, %v504
    %s506 = sshllo.u32 0, %s338
    %s507 = smul.addr 4, 24
    %s508 = scalar_lea.vmem %s1, %s507
    %509 = vst [vmem:[%s508] sm:%s506] %v505
    %s510 = scalar_lea.vmem [#allocation0], 200
    %v511 = vld [vmem:[%s510] sm:%s337]
    %v512 = vpack.c.bf16 0.0, %v511
    %s513 = sshllo.u32 0, %s338
    %s514 = smul.addr 4, 25
    %s515 = scalar_lea.vmem %s1, %s514
    %516 = vst [vmem:[%s515] sm:%s513] %v512
    %s517 = scalar_lea.vmem [#allocation0], 208
    %v518 = vld [vmem:[%s517] sm:%s337]
    %v519 = vpack.c.bf16 0.0, %v518
    %s520 = sshllo.u32 0, %s338
    %s521 = smul.addr 4, 26
    %s522 = scalar_lea.vmem %s1, %s521
    %523 = vst [vmem:[%s522] sm:%s520] %v519
    %s524 = scalar_lea.vmem [#allocation0], 216
    %v525 = vld [vmem:[%s524] sm:%s337]
    %v526 = vpack.c.bf16 0.0, %v525
    %s527 = sshllo.u32 0, %s338
    %s528 = smul.addr 4, 27
    %s529 = scalar_lea.vmem %s1, %s528
    %530 = vst [vmem:[%s529] sm:%s527] %v526
    %s531 = scalar_lea.vmem [#allocation0], 224
    %v532 = vld [vmem:[%s531] sm:%s337]
    %v533 = vpack.c.bf16 0.0, %v532
    %s534 = sshllo.u32 0, %s338
    %s535 = smul.addr 4, 28
    %s536 = scalar_lea.vmem %s1, %s535
    %537 = vst [vmem:[%s536] sm:%s534] %v533
    %s538 = scalar_lea.vmem [#allocation0], 232
    %v539 = vld [vmem:[%s538] sm:%s337]
    %v540 = vpack.c.bf16 0.0, %v539
    %s541 = sshllo.u32 0, %s338
    %s542 = smul.addr 4, 29
    %s543 = scalar_lea.vmem %s1, %s542
    %544 = vst [vmem:[%s543] sm:%s541] %v540
    %s545 = scalar_lea.vmem [#allocation0], 240
    %v546 = vld [vmem:[%s545] sm:%s337]
    %v547 = vpack.c.bf16 0.0, %v546
    %s548 = sshllo.u32 0, %s338
    %s549 = smul.addr 4, 30
    %s550 = scalar_lea.vmem %s1, %s549
    %551 = vst [vmem:[%s550] sm:%s548] %v547
    %s552 = scalar_lea.vmem [#allocation0], 248
    %v553 = vld [vmem:[%s552] sm:%s337]
    %v554 = vpack.c.bf16 0.0, %v553
    %s555 = sshllo.u32 0, %s338
    %s556 = smul.addr 4, 31
    %s557 = scalar_lea.vmem %s1, %s556
    %558 = vst [vmem:[%s557] sm:%s555] %v554

// kernel: mynet1_forward.5
$region0: #{mynet1_forward.5}
  #allocation0 [shape = 'u32[]', space=smem, size = 0x4, offset = 0x4, fixed_abs, tag = 'smem constant byte address 0x4 - core index']
  #allocation1 [shape = 'u32[144,128]{1,0:T(1,128)}', space=vmem, size = 0x12000, scoped, tag = 'internal scratch']
  %s0 = inlined_call_operand.vmem [shape: bf16[2,6,384], index: 0, kind: input, shape index: {}, may-alias: {0,1}]
  %s1 = inlined_call_operand.vmem [shape: bf16[2,6,384], index: 1, kind: input, shape index: {}, may-alias: {0,1}]
  %s2 = inlined_call_operand.vmem [shape: bf16[3,54], index: 2, kind: input, shape index: {}]
  %s3 = inlined_call_operand.vmem [shape: f32[3,1], index: 3, kind: input, shape index: {}]
  %s4 = inlined_call_operand.vmem [shape: f32[1,256], index: 4, kind: input, shape index: {}]
  %s5 = inlined_call_operand.vmem [shape: bf16[2,3,256], index: 5, kind: output, shape index: {0}]
  %s6 = inlined_call_operand.vmem [shape: f32[2,2,3,1], index: 6, kind: output, shape index: {1}]
  %s7 = inlined_call_operand.vmem [shape: f32[2,2,3,1], index: 7, kind: output, shape index: {2}]
  %8 = xla_tuple %s5, %s6, %s7
  %s9 = sld [smem:[#allocation0]]
  $region69: #{mynet1_forward.5} parent=0
    _
  %s11 = ssub.s32 1, %s9
  %s12 = scalar_select 0, %s11, %s9
  loop: start=0, step=1, limit=6
  $region2: #{mynet1_forward.5} parent=0 // loop_pre_header
    _
  $region3: #{mynet1_forward.5} parent=0 // loop_header
    %s14 = sphi 0, %s18
    %p15 = scmp.ge.s32.totalorder %s14, 6
    %s21 = sphi 0, %s33
    %s22 = sphi 0, %s29
    %s23 = sphi 0, %s21
    %s24 = sphi 0, %s22
    %s25 = sphi 0, %s23
    %s26 = sphi 0, %s24
    %s38 = sphi 0, %s40
    %s41 = sphi 0, %s38
    %s42 = sphi 0, %s41
    %s58 = sphi 0, %s42
    %s68 = sphi 0, %s70
    %s71 = sphi 0, %s68
    %s72 = sphi 0, %s71
    %s88 = sphi 0, %s72
    %s92 = sphi 0, %s92
    %s94 = sphi 0, %s92
    %s95 = sphi 0, %s94
    %s109 = sphi 0, %s95
    %s113 = sphi 0, %s113
    %s115 = sphi 0, %s113
    %s116 = sphi 0, %s115
    %s130 = sphi 0, %s116
    %s136 = sphi 0, %s138
    %s139 = sphi 0, %s136
    %s140 = sphi 0, %s139
    %s156 = sphi 0, %s140
    %s164 = sphi 0, %s166
    %s167 = sphi 0, %s164
    %s168 = sphi 0, %s167
    %s184 = sphi 0, %s168
    %s192 = sphi 0, %s194
    %s195 = sphi 0, %s192
    %s196 = sphi 0, %s195
    %s212 = sphi 0, %s196
    %s220 = sphi 0, %s222
    %s223 = sphi 0, %s220
    %s224 = sphi 0, %s223
    %s240 = sphi 0, %s224
  $region4: #{mynet1_forward.5} parent=0 // loop_header_branch
    %17 = sbr.rel (%p15) target = $region8
  $region5: #{mynet1_forward.5} parent=0 // loop_body
    %s19 = ssub.s32 %s14, 1
    %s20 = ssub.s32 %s14, 2
    %s27 = sadd.s32 1, %s22
    %p28 = scmp.ge.s32.totalorder %s27, 2
    %s29 = scalar_select %p28, 0, %s27
    %s30 = sadd.s32 1, %s21
    %s31 = scalar_select %p28, %s30, %s21
    %p32 = scmp.ge.s32.totalorder %s31, 2
    %s33 = scalar_select %p32, 0, %s31
    %s34 = ssub.s32 %s21, %s33
    %s35 = ssub.s32 %s22, %s29
    %s36 = sor.u32 %s34, %s35
    %p37 = scmp.eq.s32.totalorder %s36, 0
    %s39 = sadd.s32 %s38, 1
    %s40 = scalar_select %p37, %s38, %s39
    %p43 = pneg %p37
    %p44 = scmp.eq.s32.totalorder %s14, 3
    %p45 = por %p43, %p44
    %p46 = scmp.ne.s32.totalorder %s38, %s41
    %p47 = scmp.eq.s32.totalorder %s14, 0
    %p48 = por %p46, %p47
    %p49 = scmp.ne.s32.totalorder %s38, %s41
    %p50 = scmp.eq.s32.totalorder %s19, 3
    %p51 = por %p49, %p50
    %p52 = scmp.ne.s32.totalorder %s41, %s42
    %p53 = scmp.eq.s32.totalorder %s19, 0
    %p54 = por %p52, %p53
    %p55 = scmp.ne.s32.totalorder %s41, %s42
    %p56 = scmp.eq.s32.totalorder %s20, 3
    %p57 = por %p55, %p56
    %p59 = scmp.ne.s32.totalorder %s42, %s58
    %p60 = scmp.eq.s32.totalorder %s20, 0
    %p61 = por %p59, %p60
    %s62 = sadd.s32 %s22, 1
    %s63 = sadd.s32 %s29, 1
    %s64 = ssub.s32 %s21, %s33
    %s65 = ssub.s32 %s62, %s63
    %s66 = sor.u32 %s64, %s65
    %p67 = scmp.eq.s32.totalorder %s66, 0
    %s69 = sadd.s32 %s68, 1
    %s70 = scalar_select %p67, %s68, %s69
    %p73 = pneg %p67
    %p74 = scmp.eq.s32.totalorder %s14, 3
    %p75 = por %p73, %p74
    %p76 = scmp.ne.s32.totalorder %s68, %s71
    %p77 = scmp.eq.s32.totalorder %s14, 0
    %p78 = por %p76, %p77
    %p79 = scmp.ne.s32.totalorder %s68, %s71
    %p80 = scmp.eq.s32.totalorder %s19, 3
    %p81 = por %p79, %p80
    %p82 = scmp.ne.s32.totalorder %s71, %s72
    %p83 = scmp.eq.s32.totalorder %s19, 0
    %p84 = por %p82, %p83
    %p85 = scmp.ne.s32.totalorder %s71, %s72
    %p86 = scmp.eq.s32.totalorder %s20, 3
    %p87 = por %p85, %p86
    %p89 = scmp.ne.s32.totalorder %s72, %s88
    %p90 = scmp.eq.s32.totalorder %s20, 0
    %p91 = por %p89, %p90
    %s93 = sadd.s32 %s92, 1
    %p96 = scmp.eq.s32.totalorder %s14, 3
    %p97 = scmp.ne.s32.totalorder %s92, %s94
    %p98 = scmp.eq.s32.totalorder %s14, 0
    %p99 = por %p97, %p98
    %p100 = scmp.ne.s32.totalorder %s92, %s94
    %p101 = scmp.eq.s32.totalorder %s19, 3
    %p102 = por %p100, %p101
    %p103 = scmp.ne.s32.totalorder %s94, %s95
    %p104 = scmp.eq.s32.totalorder %s19, 0
    %p105 = por %p103, %p104
    %p106 = scmp.ne.s32.totalorder %s94, %s95
    %p107 = scmp.eq.s32.totalorder %s20, 3
    %p108 = por %p106, %p107
    %p110 = scmp.ne.s32.totalorder %s95, %s109
    %p111 = scmp.eq.s32.totalorder %s20, 0
    %p112 = por %p110, %p111
    %s114 = sadd.s32 %s113, 1
    %p117 = scmp.eq.s32.totalorder %s14, 3
    %p118 = scmp.ne.s32.totalorder %s113, %s115
    %p119 = scmp.eq.s32.totalorder %s14, 0
    %p120 = por %p118, %p119
    %p121 = scmp.ne.s32.totalorder %s113, %s115
    %p122 = scmp.eq.s32.totalorder %s19, 3
    %p123 = por %p121, %p122
    %p124 = scmp.ne.s32.totalorder %s115, %s116
    %p125 = scmp.eq.s32.totalorder %s19, 0
    %p126 = por %p124, %p125
    %p127 = scmp.ne.s32.totalorder %s115, %s116
    %p128 = scmp.eq.s32.totalorder %s20, 3
    %p129 = por %p127, %p128
    %p131 = scmp.ne.s32.totalorder %s116, %s130
    %p132 = scmp.eq.s32.totalorder %s20, 0
    %p133 = por %p131, %p132
    %s134 = ssub.s32 %s22, %s29
    %p135 = scmp.eq.s32.totalorder %s134, 0
    %s137 = sadd.s32 %s136, 1
    %s138 = scalar_select %p135, %s136, %s137
    %p141 = pneg %p135
    %p142 = scmp.eq.s32.totalorder %s14, 3
    %p143 = por %p141, %p142
    %p144 = scmp.ne.s32.totalorder %s136, %s139
    %p145 = scmp.eq.s32.totalorder %s14, 0
    %p146 = por %p144, %p145
    %p147 = scmp.ne.s32.totalorder %s136, %s139
    %p148 = scmp.eq.s32.totalorder %s19, 3
    %p149 = por %p147, %p148
    %p150 = scmp.ne.s32.totalorder %s139, %s140
    %p151 = scmp.eq.s32.totalorder %s19, 0
    %p152 = por %p150, %p151
    %p153 = scmp.ne.s32.totalorder %s139, %s140
    %p154 = scmp.eq.s32.totalorder %s20, 3
    %p155 = por %p153, %p154
    %p157 = scmp.ne.s32.totalorder %s140, %s156
    %p158 = scmp.eq.s32.totalorder %s20, 0
    %p159 = por %p157, %p158
    %s160 = ssub.s32 %s21, %s33
    %s161 = ssub.s32 %s22, %s29
    %s162 = sor.u32 %s160, %s161
    %p163 = scmp.eq.s32.totalorder %s162, 0
    %s165 = sadd.s32 %s164, 1
    %s166 = scalar_select %p163, %s164, %s165
    %p169 = pneg %p163
    %p170 = scmp.eq.s32.totalorder %s14, 3
    %p171 = por %p169, %p170
    %p172 = scmp.ne.s32.totalorder %s164, %s167
    %p173 = scmp.eq.s32.totalorder %s14, 0
    %p174 = por %p172, %p173
    %p175 = scmp.ne.s32.totalorder %s164, %s167
    %p176 = scmp.eq.s32.totalorder %s19, 3
    %p177 = por %p175, %p176
    %p178 = scmp.ne.s32.totalorder %s167, %s168
    %p179 = scmp.eq.s32.totalorder %s19, 0
    %p180 = por %p178, %p179
    %p181 = scmp.ne.s32.totalorder %s167, %s168
    %p182 = scmp.eq.s32.totalorder %s20, 3
    %p183 = por %p181, %p182
    %p185 = scmp.ne.s32.totalorder %s168, %s184
    %p186 = scmp.eq.s32.totalorder %s20, 0
    %p187 = por %p185, %p186
    %s188 = ssub.s32 %s21, %s33
    %s189 = ssub.s32 %s22, %s29
    %s190 = sor.u32 %s188, %s189
    %p191 = scmp.eq.s32.totalorder %s190, 0
    %s193 = sadd.s32 %s192, 1
    %s194 = scalar_select %p191, %s192, %s193
    %p197 = pneg %p191
    %p198 = scmp.eq.s32.totalorder %s14, 3
    %p199 = por %p197, %p198
    %p200 = scmp.ne.s32.totalorder %s192, %s195
    %p201 = scmp.eq.s32.totalorder %s14, 0
    %p202 = por %p200, %p201
    %p203 = scmp.ne.s32.totalorder %s192, %s195
    %p204 = scmp.eq.s32.totalorder %s19, 3
    %p205 = por %p203, %p204
    %p206 = scmp.ne.s32.totalorder %s195, %s196
    %p207 = scmp.eq.s32.totalorder %s19, 0
    %p208 = por %p206, %p207
    %p209 = scmp.ne.s32.totalorder %s195, %s196
    %p210 = scmp.eq.s32.totalorder %s20, 3
    %p211 = por %p209, %p210
    %p213 = scmp.ne.s32.totalorder %s196, %s212
    %p214 = scmp.eq.s32.totalorder %s20, 0
    %p215 = por %p213, %p214
    %s216 = ssub.s32 %s21, %s33
    %s217 = ssub.s32 %s22, %s29
    %s218 = sor.u32 %s216, %s217
    %p219 = scmp.eq.s32.totalorder %s218, 0
    %s221 = sadd.s32 %s220, 1
    %s222 = scalar_select %p219, %s220, %s221
    %p225 = pneg %p219
    %p226 = scmp.eq.s32.totalorder %s14, 3
    %p227 = por %p225, %p226
    %p228 = scmp.ne.s32.totalorder %s220, %s223
    %p229 = scmp.eq.s32.totalorder %s14, 0
    %p230 = por %p228, %p229
    %p231 = scmp.ne.s32.totalorder %s220, %s223
    %p232 = scmp.eq.s32.totalorder %s19, 3
    %p233 = por %p231, %p232
    %p234 = scmp.ne.s32.totalorder %s223, %s224
    %p235 = scmp.eq.s32.totalorder %s19, 0
    %p236 = por %p234, %p235
    %p237 = scmp.ne.s32.totalorder %s223, %s224
    %p238 = scmp.eq.s32.totalorder %s20, 3
    %p239 = por %p237, %p238
    %p241 = scmp.ne.s32.totalorder %s224, %s240
    %p242 = scmp.eq.s32.totalorder %s20, 0
    %p243 = por %p241, %p242
    %p244 = scmp.le.s32.totalorder 1, %s14
    %p245 = scmp.lt.s32.totalorder %s14, 5
    %p246 = pnand %p244, %p245
    %p247 = pneg %p246
    // Predicated region
    $region9: #{mynet1_forward.5} parent=5 // pred_check
      _
    $region10: #{mynet1_forward.5} parent=5 // pred_check_branch
      %249 = sbr.rel (%p246) target = $region12
    $region11: #{mynet1_forward.5} parent=5 // pred_region
      %s250 = ssub.s32 %s14, 1
      // Predicated region
      $region13: #{mynet1_forward.5} parent=11 // pred_check
        %p251 = pneg %p105
      $region14: #{mynet1_forward.5} parent=11 // pred_check_branch
        %253 = sbr.rel (%p251) target = $region16
      $region15: #{mynet1_forward.5} parent=11 // pred_region
        _
      $region16: #{mynet1_forward.5} parent=11 // pred_fallthru
        _
      // Predicated region
      $region17: #{mynet1_forward.5} parent=11 // pred_check
        %p254 = pneg %p126
      $region18: #{mynet1_forward.5} parent=11 // pred_check_branch
        %256 = sbr.rel (%p254) target = $region20
      $region19: #{mynet1_forward.5} parent=11 // pred_region
        _
      $region20: #{mynet1_forward.5} parent=11 // pred_fallthru
        _
    $region12: #{mynet1_forward.5} parent=5 // pred_fallthru
      _
    %p257 = scmp.lt.s32.totalorder %s14, 4
    // Predicated region
    $region21: #{mynet1_forward.5} parent=5 // pred_check
      %p258 = pneg %p257
    $region22: #{mynet1_forward.5} parent=5 // pred_check_branch
      %260 = sbr.rel (%p258) target = $region24
    $region23: #{mynet1_forward.5} parent=5 // pred_region
      // Predicated region
      $region25: #{mynet1_forward.5} parent=23 // pred_check
        %p261 = pneg %p48
      $region26: #{mynet1_forward.5} parent=23 // pred_check_branch
        %263 = sbr.rel (%p261) target = $region28
      $region27: #{mynet1_forward.5} parent=23 // pred_region
        %p264 = scmp.lt.s32.totalorder %s21, 1
        %s265 = scalar_select %p264, %s21, 1
        %p266 = scmp.lt.s32.totalorder %s22, 2
        %s267 = scalar_select %p266, %s22, 2
        %s268 = smul.addr %s265, 3
        %s269 = sadd.s32 %s267, %s268
        %s270 = smul.addr %s269, 4
        %s271 = scalar_lea.vmem %s0, %s270
      $region28: #{mynet1_forward.5} parent=23 // pred_fallthru
        _
      // Predicated region
      $region29: #{mynet1_forward.5} parent=23 // pred_check
        %p272 = pneg %p78
      $region30: #{mynet1_forward.5} parent=23 // pred_check_branch
        %274 = sbr.rel (%p272) target = $region32
      $region31: #{mynet1_forward.5} parent=23 // pred_region
        %s275 = sadd.s32 %s22, 1
        %p276 = scmp.lt.s32.totalorder %s21, 1
        %s277 = scalar_select %p276, %s21, 1
        %p278 = scmp.lt.s32.totalorder %s275, 2
        %s279 = scalar_select %p278, %s275, 2
        %s280 = smul.addr %s277, 3
        %s281 = sadd.s32 %s279, %s280
        %s282 = smul.addr %s281, 4
        %s283 = scalar_lea.vmem %s1, %s282
        %s284 = sadd.s32 %s22, 1
      $region32: #{mynet1_forward.5} parent=23 // pred_fallthru
        _
      // Predicated region
      $region33: #{mynet1_forward.5} parent=23 // pred_check
        %p285 = pneg %p146
      $region34: #{mynet1_forward.5} parent=23 // pred_check_branch
        %287 = sbr.rel (%p285) target = $region36
      $region35: #{mynet1_forward.5} parent=23 // pred_region
        %p288 = scmp.lt.s32.totalorder %s22, 1
        %s289 = scalar_select %p288, %s22, 1
        %s290 = scalar_lea.vmem %s4, %s289
      $region36: #{mynet1_forward.5} parent=23 // pred_fallthru
        _
    $region24: #{mynet1_forward.5} parent=5 // pred_fallthru
      _
    %p291 = scmp.le.s32.totalorder 1, %s14
    %p292 = scmp.lt.s32.totalorder %s14, 5
    %p293 = pnand %p291, %p292
    %p294 = pneg %p293
    // Predicated region
    $region37: #{mynet1_forward.5} parent=5 // pred_check
      _
    $region38: #{mynet1_forward.5} parent=5 // pred_check_branch
      %296 = sbr.rel (%p293) target = $region40
    $region39: #{mynet1_forward.5} parent=5 // pred_region
      %s297 = ssub.s32 %s14, 1
      %p298 = scmp.lt.s32.totalorder %s23, 1
      %s299 = scalar_select %p298, %s23, 1
      %p300 = scmp.lt.s32.totalorder %s24, 2
      %s301 = scalar_select %p300, %s24, 2
      %s302 = smul.addr %s299, 3
      %s303 = sadd.s32 %s301, %s302
      %s304 = smul.addr %s303, 4
      %s305 = scalar_lea.vmem %s0, %s304
      %p306 = pneg %p54
      %p307 = pneg %p51
      %s308 = sadd.s32 %s24, 1
      %p309 = scmp.lt.s32.totalorder %s23, 1
      %s310 = scalar_select %p309, %s23, 1
      %p311 = scmp.lt.s32.totalorder %s308, 2
      %s312 = scalar_select %p311, %s308, 2
      %s313 = smul.addr %s310, 3
      %s314 = sadd.s32 %s312, %s313
      %s315 = smul.addr %s314, 4
      %s316 = scalar_lea.vmem %s1, %s315
      %p317 = pneg %p84
      %p318 = pneg %p81
      %p319 = pneg %p105
      %p320 = pneg %p102
      %p321 = pneg %p126
      %p322 = pneg %p123
      %p323 = scmp.lt.s32.totalorder %s24, 1
      %s324 = scalar_select %p323, %s24, 1
      %s325 = scalar_lea.vmem %s4, %s324
      %p326 = pneg %p152
      %p327 = pneg %p149
      %p328 = pneg %p180
      %p329 = pneg %p177
      %p330 = scmp.lt.s32.totalorder %s23, 1
      %s331 = scalar_select %p330, %s23, 1
      %p332 = scmp.lt.s32.totalorder %s24, 1
      %s333 = scalar_select %p332, %s24, 1
      %s334 = smul.addr %s331, 2
      %s335 = sadd.s32 %s333, %s334
      %s336 = smul.addr %s335, 2
      %s337 = scalar_lea.vmem %s5, %s336
      %p338 = pneg %p208
      %p339 = pneg %p205
      %p340 = scmp.lt.s32.totalorder %s23, 1
      %s341 = scalar_select %p340, %s23, 1
      %p342 = scmp.lt.s32.totalorder %s24, 1
      %s343 = scalar_select %p342, %s24, 1
      %s344 = smul.addr %s341, 2
      %s345 = sadd.s32 %s343, %s344
      %s346 = smul.addr %s345, 4
      %s347 = scalar_lea.vmem %s6, %s346
      %p348 = pneg %p236
      %p349 = pneg %p233
      %p350 = scmp.lt.s32.totalorder %s23, 1
      %s351 = scalar_select %p350, %s23, 1
      %p352 = scmp.lt.s32.totalorder %s24, 1
      %s353 = scalar_select %p352, %s24, 1
      %s354 = smul.addr %s351, 2
      %s355 = sadd.s32 %s353, %s354
      %s356 = smul.addr %s355, 4
      %s357 = scalar_lea.vmem %s7, %s356
      %p358 = scmp.lt.s32.totalorder %s23, 1
      %s359 = scalar_select %p358, %s23, 1
      %p360 = scmp.lt.s32.totalorder %s24, 2
      %s361 = scalar_select %p360, %s24, 2
      %s362 = smul.addr %s359, 3
      %s363 = sadd.s32 %s361, %s362
      %s364 = smul.addr %s363, 4
      %s365 = scalar_lea.vmem %s0, %s364
      %s366 = sadd.s32 %s24, 1
      %p367 = scmp.lt.s32.totalorder %s23, 1
      %s368 = scalar_select %p367, %s23, 1
      %p369 = scmp.lt.s32.totalorder %s366, 2
      %s370 = scalar_select %p369, %s366, 2
      %s371 = smul.addr %s368, 3
      %s372 = sadd.s32 %s370, %s371
      %s373 = smul.addr %s372, 4
      %s374 = scalar_lea.vmem %s1, %s373
      %s375 = sadd.s32 %s24, 1
      %p376 = scmp.lt.s32.totalorder %s24, 1
      %s377 = scalar_select %p376, %s24, 1
      %s378 = scalar_lea.vmem %s4, %s377
      %p379 = scmp.lt.s32.totalorder %s23, 1
      %s380 = scalar_select %p379, %s23, 1
      %p381 = scmp.lt.s32.totalorder %s24, 1
      %s382 = scalar_select %p381, %s24, 1
      %s383 = smul.addr %s380, 2
      %s384 = sadd.s32 %s382, %s383
      %s385 = smul.addr %s384, 2
      %s386 = scalar_lea.vmem %s5, %s385
      %p387 = scmp.lt.s32.totalorder %s23, 1
      %s388 = scalar_select %p387, %s23, 1
      %p389 = scmp.lt.s32.totalorder %s24, 1
      %s390 = scalar_select %p389, %s24, 1
      %s391 = smul.addr %s388, 2
      %s392 = sadd.s32 %s390, %s391
      %s393 = smul.addr %s392, 4
      %s394 = scalar_lea.vmem %s6, %s393
      %p395 = scmp.lt.s32.totalorder %s23, 1
      %s396 = scalar_select %p395, %s23, 1
      %p397 = scmp.lt.s32.totalorder %s24, 1
      %s398 = scalar_select %p397, %s24, 1
      %s399 = smul.addr %s396, 2
      %s400 = sadd.s32 %s398, %s399
      %s401 = smul.addr %s400, 4
      %s402 = scalar_lea.vmem %s7, %s401
      %v404 = vld [vmem:[%s365] sm:$0x7]
      %v405 = vld [vmem:[%s374] sm:$0x7]
      %v408 = vrot.slane %v404, 5
      %v409 = vrot.slane %v405, 5
      %410 = vrot.lane.b32.xlu0 %v408, 127
      %v411 = vpop.permute.xlu0 %410
      %412 = vrot.lane.b32.xlu0 %v409, 127
      %v413 = vpop.permute.xlu0 %412
      %vm414 = vcmask 1039360
      %v415 = vsel %vm414, %v411, %v413
      %v416 = vrot.slane %v404, 2
      %v417 = vrot.slane %v405, 2
      %418 = vrot.lane.b32.xlu0 %v416, 126
      %v419 = vpop.permute.xlu0 %418
      %420 = vrot.lane.b32.xlu0 %v417, 126
      %v421 = vpop.permute.xlu0 %420
      %vm422 = vcmask 1031168
      %v423 = vsel %vm422, %v419, %v421
      %v424 = vrot.slane %v404, 7
      %v425 = vrot.slane %v405, 7
      %426 = vrot.lane.b32.xlu0 %v424, 120
      %v427 = vpop.permute.xlu0 %426
      %428 = vrot.lane.b32.xlu0 %v425, 120
      %v429 = vpop.permute.xlu0 %428
      %vm430 = vcmask 982016
      %v431 = vsel %vm430, %v427, %v429
      %v432 = vrot.slane %v404, 4
      %v433 = vrot.slane %v405, 4
      %434 = vrot.lane.b32.xlu0 %v432, 119
      %v435 = vpop.permute.xlu0 %434
      %436 = vrot.lane.b32.xlu0 %v433, 119
      %v437 = vpop.permute.xlu0 %436
      %vm438 = vcmask 973824
      %v439 = vsel %vm438, %v435, %v437
      %v440 = vrot.slane %v404, 1
      %v441 = vrot.slane %v405, 1
      %442 = vrot.lane.b32.xlu0 %v440, 118
      %v443 = vpop.permute.xlu0 %442
      %444 = vrot.lane.b32.xlu0 %v441, 118
      %v445 = vpop.permute.xlu0 %444
      %vm446 = vcmask 965632
      %v447 = vsel %vm446, %v443, %v445
      %v448 = vrot.slane %v404, 6
      %v449 = vrot.slane %v405, 6
      %450 = vrot.lane.b32.xlu0 %v448, 112
      %v451 = vpop.permute.xlu0 %450
      %452 = vrot.lane.b32.xlu0 %v449, 112
      %v453 = vpop.permute.xlu0 %452
      %vm454 = vcmask 916480
      %v455 = vsel %vm454, %v451, %v453
      %v456 = vrot.slane %v404, 3
      %v457 = vrot.slane %v405, 3
      %458 = vrot.lane.b32.xlu0 %v456, 111
      %v459 = vpop.permute.xlu0 %458
      %460 = vrot.lane.b32.xlu0 %v457, 111
      %v461 = vpop.permute.xlu0 %460
      %vm462 = vcmask 908288
      %v463 = vsel %vm462, %v459, %v461
      %464 = vrot.lane.b32.xlu0 %v404, 110
      %v465 = vpop.permute.xlu0 %464
      %466 = vrot.lane.b32.xlu0 %v405, 110
      %v467 = vpop.permute.xlu0 %466
      %vm468 = vcmask 900096
      %v469 = vsel %vm468, %v465, %v467
      %vm470 = vcmask 1042432
      %v473 = vsel %vm470, %v404, %v415
      %vm474 = vcmask 1045504
      %v476 = vsel %vm474, %v473, %v423
      %vm478 = vcmask 1040384
      %v480 = vsel %vm478, %v423, %v431
      %vm481 = vcmask 1043456
      %v483 = vsel %vm481, %v480, %v439
      %vm484 = vcmask 1046528
      %v486 = vsel %vm484, %v483, %v447
      %vm488 = vcmask 1041408
      %v490 = vsel %vm488, %v447, %v455
      %vm491 = vcmask 1044480
      %v493 = vsel %vm491, %v490, %v463
      %v495 = vld [vmem:[%s2] sm:$0x3]
      %v496 = vld [vmem:[%s3] sm:$0x7]
      %498 = vset.pattern.permute.xlu0 0
      %499 = vperm.xlu0 %498, %v496
      %v500 = vpop.permute.xlu0 %499
      %vm502 = vcmask 441344
      %v504 = vsel %vm502, %v495, 0
      %v507 = vsel %vm470, %v469, 0
      %509 = vmatprep.subr.bf16.mxu0 0
      %510 = vmatpush1.bf16.msra.mxu0 %v476
      %511 = vmatprep.subr.bf16.mxu0 0
      %512 = vmatpush1.bf16.msra.mxu0 %v486
      %513 = vmatprep.subr.bf16.mxu0 0
      %514 = vmatpush1.bf16.msra.mxu0 %v493
      %515 = vmatprep.subr.bf16.mxu0 0
      %516 = vmatpush1.bf16.msra.mxu0 %v507
      %517 = vmatprep.subr.bf16.mxu0 0
      %518 = vmatpush1.bf16.msra.mxu0 0
      %519 = vmatprep.subr.bf16.mxu0 0
      %520 = vmatpush1.bf16.msra.mxu0 0
      %521 = vmatprep.subr.bf16.mxu0 0
      %522 = vmatpush1.bf16.msra.mxu0 0
      %523 = vmatprep.subr.bf16.mxu0 0
      %524 = vmatpush1.bf16.msra.mxu0 0
      %525 = vmatprep.subr.bf16.mxu0 0
      %526 = vmatpush1.bf16.msra.mxu0 0
      %527 = vmatprep.subr.bf16.mxu0 0
      %528 = vmatpush1.bf16.msra.mxu0 0
      %529 = vmatprep.subr.bf16.mxu0 0
      %530 = vmatpush1.bf16.msra.mxu0 0
      %531 = vmatprep.subr.bf16.mxu0 0
      %532 = vmatpush1.bf16.msra.mxu0 0
      %533 = vmatprep.subr.bf16.mxu0 0
      %534 = vmatpush1.bf16.msra.mxu0 0
      %535 = vmatprep.subr.bf16.mxu0 0
      %536 = vmatpush1.bf16.msra.mxu0 0
      %537 = vmatprep.subr.bf16.mxu0 0
      %538 = vmatpush1.bf16.msra.mxu0 0
      %539 = vmatprep.subr.bf16.mxu0 0
      %540 = vmatpush1.bf16.msra.mxu0 0
      %541 = vmatprep.mubr.bf16.mxu0 0
      %542 = vmatmul.mubr.bf16.gmra.mrb[0].mxu0 %v504
      %v543 = vpop.f32.mrb[0].mxu0
      %v544 = vadd.f32 %v500, %v543
      %v545 = vpop.f32.mrb[0].mxu0
      %v546 = vpop.f32.mrb[0].mxu0
      %v547 = vpop.f32.mrb[0].mxu0
      %548 = vdwg.mxu0
      %v549 = vpack.c.bf16 %v544, %v544
      %vm550 = vcmask 1041408
      %vm551 = vsmask.f32 1280
      %vm552 = vmand %vm550, %vm551
      %v553 = vld [vmem:[%s386] sm:$0x3]
      %v554 = vsel %vm552, %v549, %v553
      %555 = vst [vmem:[%s386] sm:$0x3] %v554
      %v556 = vld [vmem:[%s378] sm:$0x1]
      %v558 = vlaneseq
      %v559 = vshrl.u32 %v558, 7
      %v560 = vsub.s32 0, %v559
      %v561 = vrot.slane %v556, %v560
      %v563 = vmul.f32 %v544, %v561
      %v564 = vsel %vm470, %v563, 0.0
      %565 = vadd.xlane.f32.xlu0 %v564
      %v566 = vpop.xlane.xlu0 %565
      %vm567 = vcmask 2048
      %568 = vst.msk [vmem:[%s394] sm:$0x7] %vm567, %v566
      %v569 = vmul.f32 %v563, %v563
      %v570 = vsel %vm470, %v569, 0.0
      %571 = vadd.xlane.f32.xlu0 %v570
      %v572 = vpop.xlane.xlu0 %571
      %573 = vst.msk [vmem:[%s402] sm:$0x7] %vm567, %v572
      %p574 = scmp.lt.s32.totalorder %s23, 1
      %s575 = scalar_select %p574, %s23, 1
      %p576 = scmp.lt.s32.totalorder %s24, 1
      %s577 = scalar_select %p576, %s24, 1
      %s578 = smul.addr %s575, 2
      %s579 = sadd.s32 %s577, %s578
      %s580 = smul.addr %s579, 2
      %s581 = scalar_lea.vmem %s5, %s580
      %p582 = scmp.lt.s32.totalorder %s23, 1
      %s583 = scalar_select %p582, %s23, 1
      %p584 = scmp.lt.s32.totalorder %s24, 1
      %s585 = scalar_select %p584, %s24, 1
      %s586 = smul.addr %s583, 2
      %s587 = sadd.s32 %s585, %s586
      %s588 = smul.addr %s587, 4
      %s589 = scalar_lea.vmem %s6, %s588
      %p590 = scmp.lt.s32.totalorder %s23, 1
      %s591 = scalar_select %p590, %s23, 1
      %p592 = scmp.lt.s32.totalorder %s24, 1
      %s593 = scalar_select %p592, %s24, 1
      %s594 = smul.addr %s591, 2
      %s595 = sadd.s32 %s593, %s594
      %s596 = smul.addr %s595, 4
      %s597 = scalar_lea.vmem %s7, %s596
      // Predicated region
      $region41: #{mynet1_forward.5} parent=39 // pred_check
        %p598 = pneg %p177
      $region42: #{mynet1_forward.5} parent=39 // pred_check_branch
        %600 = sbr.rel (%p598) target = $region44
      $region43: #{mynet1_forward.5} parent=39 // pred_region
        _
      $region44: #{mynet1_forward.5} parent=39 // pred_fallthru
        _
      // Predicated region
      $region45: #{mynet1_forward.5} parent=39 // pred_check
        %p601 = pneg %p205
      $region46: #{mynet1_forward.5} parent=39 // pred_check_branch
        %603 = sbr.rel (%p601) target = $region48
      $region47: #{mynet1_forward.5} parent=39 // pred_region
        _
      $region48: #{mynet1_forward.5} parent=39 // pred_fallthru
        _
      // Predicated region
      $region49: #{mynet1_forward.5} parent=39 // pred_check
        %p604 = pneg %p233
      $region50: #{mynet1_forward.5} parent=39 // pred_check_branch
        %606 = sbr.rel (%p604) target = $region52
      $region51: #{mynet1_forward.5} parent=39 // pred_region
        _
      $region52: #{mynet1_forward.5} parent=39 // pred_fallthru
        _
    $region40: #{mynet1_forward.5} parent=5 // pred_fallthru
      _
    %p607 = scmp.le.s32.totalorder 2, %s14
    // Predicated region
    $region53: #{mynet1_forward.5} parent=5 // pred_check
      %p608 = pneg %p607
    $region54: #{mynet1_forward.5} parent=5 // pred_check_branch
      %610 = sbr.rel (%p608) target = $region56
    $region55: #{mynet1_forward.5} parent=5 // pred_region
      %s611 = ssub.s32 %s14, 2
      // Predicated region
      $region57: #{mynet1_forward.5} parent=55 // pred_check
        %p612 = pneg %p183
      $region58: #{mynet1_forward.5} parent=55 // pred_check_branch
        %614 = sbr.rel (%p612) target = $region60
      $region59: #{mynet1_forward.5} parent=55 // pred_region
        %p615 = scmp.lt.s32.totalorder %s25, 1
        %s616 = scalar_select %p615, %s25, 1
        %p617 = scmp.lt.s32.totalorder %s26, 1
        %s618 = scalar_select %p617, %s26, 1
        %s619 = smul.addr %s616, 2
        %s620 = sadd.s32 %s618, %s619
        %s621 = smul.addr %s620, 2
        %s622 = scalar_lea.vmem %s5, %s621
      $region60: #{mynet1_forward.5} parent=55 // pred_fallthru
        _
      // Predicated region
      $region61: #{mynet1_forward.5} parent=55 // pred_check
        %p623 = pneg %p211
      $region62: #{mynet1_forward.5} parent=55 // pred_check_branch
        %625 = sbr.rel (%p623) target = $region64
      $region63: #{mynet1_forward.5} parent=55 // pred_region
        %p626 = scmp.lt.s32.totalorder %s25, 1
        %s627 = scalar_select %p626, %s25, 1
        %p628 = scmp.lt.s32.totalorder %s26, 1
        %s629 = scalar_select %p628, %s26, 1
        %s630 = smul.addr %s627, 2
        %s631 = sadd.s32 %s629, %s630
        %s632 = smul.addr %s631, 4
        %s633 = scalar_lea.vmem %s6, %s632
      $region64: #{mynet1_forward.5} parent=55 // pred_fallthru
        _
      // Predicated region
      $region65: #{mynet1_forward.5} parent=55 // pred_check
        %p634 = pneg %p239
      $region66: #{mynet1_forward.5} parent=55 // pred_check_branch
        %636 = sbr.rel (%p634) target = $region68
      $region67: #{mynet1_forward.5} parent=55 // pred_region
        %p637 = scmp.lt.s32.totalorder %s25, 1
        %s638 = scalar_select %p637, %s25, 1
        %p639 = scmp.lt.s32.totalorder %s26, 1
        %s640 = scalar_select %p639, %s26, 1
        %s641 = smul.addr %s638, 2
        %s642 = sadd.s32 %s640, %s641
        %s643 = smul.addr %s642, 4
        %s644 = scalar_lea.vmem %s7, %s643
      $region68: #{mynet1_forward.5} parent=55 // pred_fallthru
        _
    $region56: #{mynet1_forward.5} parent=5 // pred_fallthru
      _
  $region6: #{mynet1_forward.5} parent=0 // loop_footer
    %s18 = sadd.s32 1, %s14
  $region7: #{mynet1_forward.5} parent=0 // loop_footer_branch
    %13 = sbr.rel target = $region3
  $region8: #{mynet1_forward.5} parent=0 // loop_exit
    _

// kernel: mynet1_forward.4
$region0: #{mynet1_forward.4}
  #allocation0 [shape = 'u32[]', space=smem, size = 0x4, offset = 0x4, fixed_abs, tag = 'smem constant byte address 0x4 - core index']
  #allocation1 [shape = 'u32[144,128]{1,0:T(1,128)}', space=vmem, size = 0x12000, scoped, tag = 'internal scratch']
  %s0 = inlined_call_operand.vmem [shape: bf16[2,4,512], index: 0, kind: input, shape index: {}, may-alias: {0,1}]
  %s1 = inlined_call_operand.vmem [shape: bf16[2,4,512], index: 1, kind: input, shape index: {}, may-alias: {0,1}]
  %s2 = inlined_call_operand.vmem [shape: bf16[24,16], index: 2, kind: input, shape index: {}]
  %s3 = inlined_call_operand.vmem [shape: f32[6,1], index: 3, kind: input, shape index: {}]
  %s4 = inlined_call_operand.vmem [shape: bf16[2,6,384], index: 4, kind: output, shape index: {}]
  %s5 = sld [smem:[#allocation0]]
  $region49: #{mynet1_forward.4} parent=0
    _
  %s7 = ssub.s32 1, %s5
  %s8 = scalar_select 0, %s7, %s5
  loop: start=0, step=1, limit=8
  $region2: #{mynet1_forward.4} parent=0 // loop_pre_header
    _
  $region3: #{mynet1_forward.4} parent=0 // loop_header
    %s10 = sphi 0, %s14
    %p11 = scmp.ge.s32.totalorder %s10, 8
    %s17 = sphi 0, %s29
    %s18 = sphi 0, %s25
    %s19 = sphi 0, %s17
    %s20 = sphi 0, %s18
    %s21 = sphi 0, %s19
    %s22 = sphi 0, %s20
    %s34 = sphi 0, %s36
    %s37 = sphi 0, %s34
    %s38 = sphi 0, %s37
    %s54 = sphi 0, %s38
    %s64 = sphi 0, %s66
    %s67 = sphi 0, %s64
    %s68 = sphi 0, %s67
    %s84 = sphi 0, %s68
    %s88 = sphi 0, %s88
    %s90 = sphi 0, %s88
    %s91 = sphi 0, %s90
    %s105 = sphi 0, %s91
    %s109 = sphi 0, %s109
    %s111 = sphi 0, %s109
    %s112 = sphi 0, %s111
    %s126 = sphi 0, %s112
    %s134 = sphi 0, %s136
    %s137 = sphi 0, %s134
    %s138 = sphi 0, %s137
    %s154 = sphi 0, %s138
  $region4: #{mynet1_forward.4} parent=0 // loop_header_branch
    %13 = sbr.rel (%p11) target = $region8
  $region5: #{mynet1_forward.4} parent=0 // loop_body
    %s15 = ssub.s32 %s10, 1
    %s16 = ssub.s32 %s10, 2
    %s23 = sadd.s32 1, %s18
    %p24 = scmp.ge.s32.totalorder %s23, 3
    %s25 = scalar_select %p24, 0, %s23
    %s26 = sadd.s32 1, %s17
    %s27 = scalar_select %p24, %s26, %s17
    %p28 = scmp.ge.s32.totalorder %s27, 2
    %s29 = scalar_select %p28, 0, %s27
    %s30 = ssub.s32 %s17, %s29
    %s31 = ssub.s32 %s18, %s25
    %s32 = sor.u32 %s30, %s31
    %p33 = scmp.eq.s32.totalorder %s32, 0
    %s35 = sadd.s32 %s34, 1
    %s36 = scalar_select %p33, %s34, %s35
    %p39 = pneg %p33
    %p40 = scmp.eq.s32.totalorder %s10, 5
    %p41 = por %p39, %p40
    %p42 = scmp.ne.s32.totalorder %s34, %s37
    %p43 = scmp.eq.s32.totalorder %s10, 0
    %p44 = por %p42, %p43
    %p45 = scmp.ne.s32.totalorder %s34, %s37
    %p46 = scmp.eq.s32.totalorder %s15, 5
    %p47 = por %p45, %p46
    %p48 = scmp.ne.s32.totalorder %s37, %s38
    %p49 = scmp.eq.s32.totalorder %s15, 0
    %p50 = por %p48, %p49
    %p51 = scmp.ne.s32.totalorder %s37, %s38
    %p52 = scmp.eq.s32.totalorder %s16, 5
    %p53 = por %p51, %p52
    %p55 = scmp.ne.s32.totalorder %s38, %s54
    %p56 = scmp.eq.s32.totalorder %s16, 0
    %p57 = por %p55, %p56
    %s58 = sadd.s32 %s18, 1
    %s59 = sadd.s32 %s25, 1
    %s60 = ssub.s32 %s17, %s29
    %s61 = ssub.s32 %s58, %s59
    %s62 = sor.u32 %s60, %s61
    %p63 = scmp.eq.s32.totalorder %s62, 0
    %s65 = sadd.s32 %s64, 1
    %s66 = scalar_select %p63, %s64, %s65
    %p69 = pneg %p63
    %p70 = scmp.eq.s32.totalorder %s10, 5
    %p71 = por %p69, %p70
    %p72 = scmp.ne.s32.totalorder %s64, %s67
    %p73 = scmp.eq.s32.totalorder %s10, 0
    %p74 = por %p72, %p73
    %p75 = scmp.ne.s32.totalorder %s64, %s67
    %p76 = scmp.eq.s32.totalorder %s15, 5
    %p77 = por %p75, %p76
    %p78 = scmp.ne.s32.totalorder %s67, %s68
    %p79 = scmp.eq.s32.totalorder %s15, 0
    %p80 = por %p78, %p79
    %p81 = scmp.ne.s32.totalorder %s67, %s68
    %p82 = scmp.eq.s32.totalorder %s16, 5
    %p83 = por %p81, %p82
    %p85 = scmp.ne.s32.totalorder %s68, %s84
    %p86 = scmp.eq.s32.totalorder %s16, 0
    %p87 = por %p85, %p86
    %s89 = sadd.s32 %s88, 1
    %p92 = scmp.eq.s32.totalorder %s10, 5
    %p93 = scmp.ne.s32.totalorder %s88, %s90
    %p94 = scmp.eq.s32.totalorder %s10, 0
    %p95 = por %p93, %p94
    %p96 = scmp.ne.s32.totalorder %s88, %s90
    %p97 = scmp.eq.s32.totalorder %s15, 5
    %p98 = por %p96, %p97
    %p99 = scmp.ne.s32.totalorder %s90, %s91
    %p100 = scmp.eq.s32.totalorder %s15, 0
    %p101 = por %p99, %p100
    %p102 = scmp.ne.s32.totalorder %s90, %s91
    %p103 = scmp.eq.s32.totalorder %s16, 5
    %p104 = por %p102, %p103
    %p106 = scmp.ne.s32.totalorder %s91, %s105
    %p107 = scmp.eq.s32.totalorder %s16, 0
    %p108 = por %p106, %p107
    %s110 = sadd.s32 %s109, 1
    %p113 = scmp.eq.s32.totalorder %s10, 5
    %p114 = scmp.ne.s32.totalorder %s109, %s111
    %p115 = scmp.eq.s32.totalorder %s10, 0
    %p116 = por %p114, %p115
    %p117 = scmp.ne.s32.totalorder %s109, %s111
    %p118 = scmp.eq.s32.totalorder %s15, 5
    %p119 = por %p117, %p118
    %p120 = scmp.ne.s32.totalorder %s111, %s112
    %p121 = scmp.eq.s32.totalorder %s15, 0
    %p122 = por %p120, %p121
    %p123 = scmp.ne.s32.totalorder %s111, %s112
    %p124 = scmp.eq.s32.totalorder %s16, 5
    %p125 = por %p123, %p124
    %p127 = scmp.ne.s32.totalorder %s112, %s126
    %p128 = scmp.eq.s32.totalorder %s16, 0
    %p129 = por %p127, %p128
    %s130 = ssub.s32 %s17, %s29
    %s131 = ssub.s32 %s18, %s25
    %s132 = sor.u32 %s130, %s131
    %p133 = scmp.eq.s32.totalorder %s132, 0
    %s135 = sadd.s32 %s134, 1
    %s136 = scalar_select %p133, %s134, %s135
    %p139 = pneg %p133
    %p140 = scmp.eq.s32.totalorder %s10, 5
    %p141 = por %p139, %p140
    %p142 = scmp.ne.s32.totalorder %s134, %s137
    %p143 = scmp.eq.s32.totalorder %s10, 0
    %p144 = por %p142, %p143
    %p145 = scmp.ne.s32.totalorder %s134, %s137
    %p146 = scmp.eq.s32.totalorder %s15, 5
    %p147 = por %p145, %p146
    %p148 = scmp.ne.s32.totalorder %s137, %s138
    %p149 = scmp.eq.s32.totalorder %s15, 0
    %p150 = por %p148, %p149
    %p151 = scmp.ne.s32.totalorder %s137, %s138
    %p152 = scmp.eq.s32.totalorder %s16, 5
    %p153 = por %p151, %p152
    %p155 = scmp.ne.s32.totalorder %s138, %s154
    %p156 = scmp.eq.s32.totalorder %s16, 0
    %p157 = por %p155, %p156
    %p158 = scmp.le.s32.totalorder 1, %s10
    %p159 = scmp.lt.s32.totalorder %s10, 7
    %p160 = pnand %p158, %p159
    %p161 = pneg %p160
    // Predicated region
    $region9: #{mynet1_forward.4} parent=5 // pred_check
      _
    $region10: #{mynet1_forward.4} parent=5 // pred_check_branch
      %163 = sbr.rel (%p160) target = $region12
    $region11: #{mynet1_forward.4} parent=5 // pred_region
      %s164 = ssub.s32 %s10, 1
      // Predicated region
      $region13: #{mynet1_forward.4} parent=11 // pred_check
        %p165 = pneg %p101
      $region14: #{mynet1_forward.4} parent=11 // pred_check_branch
        %167 = sbr.rel (%p165) target = $region16
      $region15: #{mynet1_forward.4} parent=11 // pred_region
        _
      $region16: #{mynet1_forward.4} parent=11 // pred_fallthru
        _
      // Predicated region
      $region17: #{mynet1_forward.4} parent=11 // pred_check
        %p168 = pneg %p122
      $region18: #{mynet1_forward.4} parent=11 // pred_check_branch
        %170 = sbr.rel (%p168) target = $region20
      $region19: #{mynet1_forward.4} parent=11 // pred_region
        _
      $region20: #{mynet1_forward.4} parent=11 // pred_fallthru
        _
    $region12: #{mynet1_forward.4} parent=5 // pred_fallthru
      _
    %p171 = scmp.lt.s32.totalorder %s10, 6
    // Predicated region
    $region21: #{mynet1_forward.4} parent=5 // pred_check
      %p172 = pneg %p171
    $region22: #{mynet1_forward.4} parent=5 // pred_check_branch
      %174 = sbr.rel (%p172) target = $region24
    $region23: #{mynet1_forward.4} parent=5 // pred_region
      // Predicated region
      $region25: #{mynet1_forward.4} parent=23 // pred_check
        %p175 = pneg %p44
      $region26: #{mynet1_forward.4} parent=23 // pred_check_branch
        %177 = sbr.rel (%p175) target = $region28
      $region27: #{mynet1_forward.4} parent=23 // pred_region
        %p178 = scmp.lt.s32.totalorder %s17, 1
        %s179 = scalar_select %p178, %s17, 1
        %p180 = scmp.lt.s32.totalorder %s18, 3
        %s181 = scalar_select %p180, %s18, 3
        %s182 = smul.addr %s179, 4
        %s183 = sadd.s32 %s181, %s182
        %s184 = smul.addr %s183, 2
        %s185 = scalar_lea.vmem %s0, %s184
      $region28: #{mynet1_forward.4} parent=23 // pred_fallthru
        _
      // Predicated region
      $region29: #{mynet1_forward.4} parent=23 // pred_check
        %p186 = pneg %p74
      $region30: #{mynet1_forward.4} parent=23 // pred_check_branch
        %188 = sbr.rel (%p186) target = $region32
      $region31: #{mynet1_forward.4} parent=23 // pred_region
        %s189 = sadd.s32 %s18, 1
        %p190 = scmp.lt.s32.totalorder %s17, 1
        %s191 = scalar_select %p190, %s17, 1
        %p192 = scmp.lt.s32.totalorder %s189, 3
        %s193 = scalar_select %p192, %s189, 3
        %s194 = smul.addr %s191, 4
        %s195 = sadd.s32 %s193, %s194
        %s196 = smul.addr %s195, 2
        %s197 = scalar_lea.vmem %s1, %s196
        %s198 = sadd.s32 %s18, 1
      $region32: #{mynet1_forward.4} parent=23 // pred_fallthru
        _
    $region24: #{mynet1_forward.4} parent=5 // pred_fallthru
      _
    %p199 = scmp.le.s32.totalorder 1, %s10
    %p200 = scmp.lt.s32.totalorder %s10, 7
    %p201 = pnand %p199, %p200
    %p202 = pneg %p201
    // Predicated region
    $region33: #{mynet1_forward.4} parent=5 // pred_check
      _
    $region34: #{mynet1_forward.4} parent=5 // pred_check_branch
      %204 = sbr.rel (%p201) target = $region36
    $region35: #{mynet1_forward.4} parent=5 // pred_region
      %s205 = ssub.s32 %s10, 1
      %p206 = scmp.lt.s32.totalorder %s19, 1
      %s207 = scalar_select %p206, %s19, 1
      %p208 = scmp.lt.s32.totalorder %s20, 3
      %s209 = scalar_select %p208, %s20, 3
      %s210 = smul.addr %s207, 4
      %s211 = sadd.s32 %s209, %s210
      %s212 = smul.addr %s211, 2
      %s213 = scalar_lea.vmem %s0, %s212
      %p214 = pneg %p50
      %p215 = pneg %p47
      %s216 = sadd.s32 %s20, 1
      %p217 = scmp.lt.s32.totalorder %s19, 1
      %s218 = scalar_select %p217, %s19, 1
      %p219 = scmp.lt.s32.totalorder %s216, 3
      %s220 = scalar_select %p219, %s216, 3
      %s221 = smul.addr %s218, 4
      %s222 = sadd.s32 %s220, %s221
      %s223 = smul.addr %s222, 2
      %s224 = scalar_lea.vmem %s1, %s223
      %p225 = pneg %p80
      %p226 = pneg %p77
      %p227 = pneg %p101
      %p228 = pneg %p98
      %p229 = pneg %p122
      %p230 = pneg %p119
      %p231 = pneg %p150
      %p232 = pneg %p147
      %p233 = scmp.lt.s32.totalorder %s19, 1
      %s234 = scalar_select %p233, %s19, 1
      %p235 = scmp.lt.s32.totalorder %s20, 2
      %s236 = scalar_select %p235, %s20, 2
      %s237 = smul.addr %s234, 3
      %s238 = sadd.s32 %s236, %s237
      %s239 = smul.addr %s238, 4
      %s240 = scalar_lea.vmem %s4, %s239
      %p241 = scmp.lt.s32.totalorder %s19, 1
      %s242 = scalar_select %p241, %s19, 1
      %p243 = scmp.lt.s32.totalorder %s20, 3
      %s244 = scalar_select %p243, %s20, 3
      %s245 = smul.addr %s242, 4
      %s246 = sadd.s32 %s244, %s245
      %s247 = smul.addr %s246, 2
      %s248 = scalar_lea.vmem %s0, %s247
      %s249 = sadd.s32 %s20, 1
      %p250 = scmp.lt.s32.totalorder %s19, 1
      %s251 = scalar_select %p250, %s19, 1
      %p252 = scmp.lt.s32.totalorder %s249, 3
      %s253 = scalar_select %p252, %s249, 3
      %s254 = smul.addr %s251, 4
      %s255 = sadd.s32 %s253, %s254
      %s256 = smul.addr %s255, 2
      %s257 = scalar_lea.vmem %s1, %s256
      %s258 = sadd.s32 %s20, 1
      %p259 = scmp.lt.s32.totalorder %s19, 1
      %s260 = scalar_select %p259, %s19, 1
      %p261 = scmp.lt.s32.totalorder %s20, 2
      %s262 = scalar_select %p261, %s20, 2
      %s263 = smul.addr %s260, 3
      %s264 = sadd.s32 %s262, %s263
      %s265 = smul.addr %s264, 4
      %s266 = scalar_lea.vmem %s4, %s265
      %v268 = vld [vmem:[%s248] sm:$0x3]
      %v269 = vld [vmem:[%s257] sm:$0x3]
      %v272 = vrot.slane %v268, 6
      %v273 = vrot.slane %v269, 6
      %274 = vrot.lane.b32.xlu0 %v272, 127
      %v275 = vpop.permute.xlu0 %274
      %276 = vrot.lane.b32.xlu0 %v273, 127
      %v277 = vpop.permute.xlu0 %276
      %vm278 = vcmask 1039360
      %v279 = vsel %vm278, %v275, %v277
      %v280 = vrot.slane %v268, 4
      %v281 = vrot.slane %v269, 4
      %282 = vrot.lane.b32.xlu0 %v280, 120
      %v283 = vpop.permute.xlu0 %282
      %284 = vrot.lane.b32.xlu0 %v281, 120
      %v285 = vpop.permute.xlu0 %284
      %vm286 = vcmask 982016
      %v287 = vsel %vm286, %v283, %v285
      %v288 = vrot.slane %v268, 2
      %v289 = vrot.slane %v269, 2
      %290 = vrot.lane.b32.xlu0 %v288, 119
      %v291 = vpop.permute.xlu0 %290
      %292 = vrot.lane.b32.xlu0 %v289, 119
      %v293 = vpop.permute.xlu0 %292
      %vm294 = vcmask 973824
      %v295 = vsel %vm294, %v291, %v293
      %vm296 = vcmask 1041408
      %v299 = vsel %vm296, %v268, %v279
      %vm300 = vcmask 1043456
      %v302 = vsel %vm300, %v299, %v287
      %vm303 = vcmask 1045504
      %v305 = vsel %vm303, %v302, %v295
      %v307 = vld [vmem:[%s2] sm:$0xf]
      %v308 = vld [vmem:[%s2 + $0x4] sm:$0xf]
      %v309 = vld [vmem:[%s2 + $0x8] sm:$0xf]
      %v313 = vunpack.c.l.b16 %v307
      %v314 = vunpack.c.l.b16 %v308
      %v315 = vunpack.c.l.b16 %v309
      %v316 = vpack.c.b16 %v314, %v313
      %v317 = vpack.c.b16 %v315, %v315
      %vm318 = vcmask 130048
      %v320 = vsel %vm318, %v316, 0
      %v323 = vsel %vm318, %v317, 0
      %325 = vmatprep.subr.bf16.mxu0 0
      %326 = vmatpush1.bf16.msra.mxu0 %v305
      %327 = vmatprep.subr.bf16.mxu0 0
      %328 = vmatpush1.bf16.msra.mxu0 0
      %329 = vmatprep.subr.bf16.mxu0 0
      %330 = vmatpush1.bf16.msra.mxu0 0
      %331 = vmatprep.subr.bf16.mxu0 0
      %332 = vmatpush1.bf16.msra.mxu0 0
      %333 = vmatprep.subr.bf16.mxu0 0
      %334 = vmatpush1.bf16.msra.mxu0 0
      %335 = vmatprep.subr.bf16.mxu0 0
      %336 = vmatpush1.bf16.msra.mxu0 0
      %337 = vmatprep.subr.bf16.mxu0 0
      %338 = vmatpush1.bf16.msra.mxu0 0
      %339 = vmatprep.subr.bf16.mxu0 0
      %340 = vmatpush1.bf16.msra.mxu0 0
      %341 = vmatprep.subr.bf16.mxu0 0
      %342 = vmatpush1.bf16.msra.mxu0 0
      %343 = vmatprep.subr.bf16.mxu0 0
      %344 = vmatpush1.bf16.msra.mxu0 0
      %345 = vmatprep.subr.bf16.mxu0 0
      %346 = vmatpush1.bf16.msra.mxu0 0
      %347 = vmatprep.subr.bf16.mxu0 0
      %348 = vmatpush1.bf16.msra.mxu0 0
      %349 = vmatprep.subr.bf16.mxu0 0
      %350 = vmatpush1.bf16.msra.mxu0 0
      %351 = vmatprep.subr.bf16.mxu0 0
      %352 = vmatpush1.bf16.msra.mxu0 0
      %353 = vmatprep.subr.bf16.mxu0 0
      %354 = vmatpush1.bf16.msra.mxu0 0
      %355 = vmatprep.subr.bf16.mxu0 0
      %356 = vmatpush1.bf16.msra.mxu0 0
      %357 = vmatprep.mubr.bf16.mxu0 0
      %358 = vmatmul.mubr.bf16.gmra.mrb[0].mxu0 %v320
      %v359 = vpop.f32.mrb[0].mxu0
      %v360 = vadd.f32 0.0, %v359
      %v361 = vpop.f32.mrb[0].mxu0
      %v362 = vpop.f32.mrb[0].mxu0
      %v363 = vadd.f32 0.0, %v362
      %v364 = vpop.f32.mrb[0].mxu0
      %365 = vmatprep.mubr.bf16.mxu0 0
      %366 = vmatmul.mubr.bf16.gmra.mrb[0].mxu0 %v323
      %v367 = vpop.f32.mrb[0].mxu0
      %v368 = vadd.f32 0.0, %v367
      %v369 = vpop.f32.mrb[0].mxu0
      %v370 = vpop.f32.mrb[0].mxu0
      %v371 = vpop.f32.mrb[0].mxu0
      %372 = vdwg.mxu0
      %v375 = vrot.slane %v360, 6
      %v376 = vrot.slane %v363, 6
      %v377 = vsel %vm296, %v375, %v376
      %v379 = vmax.f32 %v360, %v377
      %v381 = vrot.slane %v368, 6
      %v383 = vmax.f32 %v363, %v381
      %v384 = vmax.f32 %v368, %v381
      %v387 = vrot.slane %v383, 4
      %v388 = vrot.slane %v384, 4
      %v389 = vsel %vm300, %v387, %v388
      %v391 = vmax.f32 %v379, %v389
      %v392 = vld [vmem:[%s3] sm:$0x3f]
      %394 = vset.pattern.permute.xlu0 0
      %395 = vperm.xlu0 %394, %v392
      %v396 = vpop.permute.xlu0 %395
      %v398 = vadd.f32 %v391, %v396
      %v399 = vpack.c.bf16 %v398, %v398
      %400 = vst [vmem:[%s266] sm:$0x7] %v399
      %p401 = scmp.lt.s32.totalorder %s19, 1
      %s402 = scalar_select %p401, %s19, 1
      %p403 = scmp.lt.s32.totalorder %s20, 2
      %s404 = scalar_select %p403, %s20, 2
      %s405 = smul.addr %s402, 3
      %s406 = sadd.s32 %s404, %s405
      %s407 = smul.addr %s406, 4
      %s408 = scalar_lea.vmem %s4, %s407
      // Predicated region
      $region37: #{mynet1_forward.4} parent=35 // pred_check
        %p409 = pneg %p147
      $region38: #{mynet1_forward.4} parent=35 // pred_check_branch
        %411 = sbr.rel (%p409) target = $region40
      $region39: #{mynet1_forward.4} parent=35 // pred_region
        _
      $region40: #{mynet1_forward.4} parent=35 // pred_fallthru
        _
    $region36: #{mynet1_forward.4} parent=5 // pred_fallthru
      _
    %p412 = scmp.le.s32.totalorder 2, %s10
    // Predicated region
    $region41: #{mynet1_forward.4} parent=5 // pred_check
      %p413 = pneg %p412
    $region42: #{mynet1_forward.4} parent=5 // pred_check_branch
      %415 = sbr.rel (%p413) target = $region44
    $region43: #{mynet1_forward.4} parent=5 // pred_region
      %s416 = ssub.s32 %s10, 2
      // Predicated region
      $region45: #{mynet1_forward.4} parent=43 // pred_check
        %p417 = pneg %p153
      $region46: #{mynet1_forward.4} parent=43 // pred_check_branch
        %419 = sbr.rel (%p417) target = $region48
      $region47: #{mynet1_forward.4} parent=43 // pred_region
        %p420 = scmp.lt.s32.totalorder %s21, 1
        %s421 = scalar_select %p420, %s21, 1
        %p422 = scmp.lt.s32.totalorder %s22, 2
        %s423 = scalar_select %p422, %s22, 2
        %s424 = smul.addr %s421, 3
        %s425 = sadd.s32 %s423, %s424
        %s426 = smul.addr %s425, 4
        %s427 = scalar_lea.vmem %s4, %s426
      $region48: #{mynet1_forward.4} parent=43 // pred_fallthru
        _
    $region44: #{mynet1_forward.4} parent=5 // pred_fallthru
      _
  $region6: #{mynet1_forward.4} parent=0 // loop_footer
    %s14 = sadd.s32 1, %s10
  $region7: #{mynet1_forward.4} parent=0 // loop_footer_branch
    %9 = sbr.rel target = $region3
  $region8: #{mynet1_forward.4} parent=0 // loop_exit
    _

// kernel: mynet1_forward.6
$region0: #{mynet1_forward.6}
  #allocation0 [shape = 'u32[]', space=smem, size = 0x4, offset = 0x4, fixed_abs, tag = 'smem constant byte address 0x4 - core index']
  #allocation1 [shape = 'u32[144,128]{1,0:T(1,128)}', space=vmem, size = 0x12000, scoped, tag = 'internal scratch']
  %s0 = inlined_call_operand.vmem [shape: bf16[2,3,256], index: 0, kind: input, shape index: {}, may-alias: {0,1}]
  %s1 = inlined_call_operand.vmem [shape: bf16[2,3,256], index: 1, kind: input, shape index: {}, may-alias: {0,1}]
  %s2 = inlined_call_operand.vmem [shape: f32[3,1], index: 2, kind: input, shape index: {}]
  %s3 = inlined_call_operand.vmem [shape: f32[3,1], index: 3, kind: input, shape index: {}]
  %s4 = inlined_call_operand.vmem [shape: bf16[6,27], index: 4, kind: input, shape index: {}]
  %s5 = inlined_call_operand.vmem [shape: f32[6,1], index: 5, kind: input, shape index: {}]
  %s6 = inlined_call_operand.vmem [shape: bf16[2,6,128], index: 6, kind: output, shape index: {}]
  %s7 = sld [smem:[#allocation0]]
  $region57: #{mynet1_forward.6} parent=0
    _
  %s9 = ssub.s32 1, %s7
  %s10 = scalar_select 0, %s9, %s7
  loop: start=0, step=1, limit=4
  $region2: #{mynet1_forward.6} parent=0 // loop_pre_header
    _
  $region3: #{mynet1_forward.6} parent=0 // loop_header
    %s12 = sphi 0, %s16
    %p13 = scmp.ge.s32.totalorder %s12, 4
    %s19 = sphi 0, %s31
    %s20 = sphi 0, %s27
    %s21 = sphi 0, %s19
    %s22 = sphi 0, %s20
    %s23 = sphi 0, %s21
    %s24 = sphi 0, %s22
    %s36 = sphi 0, %s38
    %s39 = sphi 0, %s36
    %s40 = sphi 0, %s39
    %s56 = sphi 0, %s40
    %s66 = sphi 0, %s68
    %s69 = sphi 0, %s66
    %s70 = sphi 0, %s69
    %s86 = sphi 0, %s70
    %s90 = sphi 0, %s90
    %s92 = sphi 0, %s90
    %s93 = sphi 0, %s92
    %s107 = sphi 0, %s93
    %s111 = sphi 0, %s111
    %s113 = sphi 0, %s111
    %s114 = sphi 0, %s113
    %s128 = sphi 0, %s114
    %s132 = sphi 0, %s132
    %s134 = sphi 0, %s132
    %s135 = sphi 0, %s134
    %s149 = sphi 0, %s135
    %s153 = sphi 0, %s153
    %s155 = sphi 0, %s153
    %s156 = sphi 0, %s155
    %s170 = sphi 0, %s156
    %s178 = sphi 0, %s180
    %s181 = sphi 0, %s178
    %s182 = sphi 0, %s181
    %s198 = sphi 0, %s182
  $region4: #{mynet1_forward.6} parent=0 // loop_header_branch
    %15 = sbr.rel (%p13) target = $region8
  $region5: #{mynet1_forward.6} parent=0 // loop_body
    %s17 = ssub.s32 %s12, 1
    %s18 = ssub.s32 %s12, 2
    %s25 = sadd.s32 1, %s20
    %p26 = scmp.ge.s32.totalorder %s25, 1
    %s27 = scalar_select %p26, 0, %s25
    %s28 = sadd.s32 1, %s19
    %s29 = scalar_select %p26, %s28, %s19
    %p30 = scmp.ge.s32.totalorder %s29, 2
    %s31 = scalar_select %p30, 0, %s29
    %s32 = ssub.s32 %s19, %s31
    %s33 = ssub.s32 %s20, %s27
    %s34 = sor.u32 %s32, %s33
    %p35 = scmp.eq.s32.totalorder %s34, 0
    %s37 = sadd.s32 %s36, 1
    %s38 = scalar_select %p35, %s36, %s37
    %p41 = pneg %p35
    %p42 = scmp.eq.s32.totalorder %s12, 1
    %p43 = por %p41, %p42
    %p44 = scmp.ne.s32.totalorder %s36, %s39
    %p45 = scmp.eq.s32.totalorder %s12, 0
    %p46 = por %p44, %p45
    %p47 = scmp.ne.s32.totalorder %s36, %s39
    %p48 = scmp.eq.s32.totalorder %s17, 1
    %p49 = por %p47, %p48
    %p50 = scmp.ne.s32.totalorder %s39, %s40
    %p51 = scmp.eq.s32.totalorder %s17, 0
    %p52 = por %p50, %p51
    %p53 = scmp.ne.s32.totalorder %s39, %s40
    %p54 = scmp.eq.s32.totalorder %s18, 1
    %p55 = por %p53, %p54
    %p57 = scmp.ne.s32.totalorder %s40, %s56
    %p58 = scmp.eq.s32.totalorder %s18, 0
    %p59 = por %p57, %p58
    %s60 = sadd.s32 %s20, 1
    %s61 = sadd.s32 %s27, 1
    %s62 = ssub.s32 %s19, %s31
    %s63 = ssub.s32 %s60, %s61
    %s64 = sor.u32 %s62, %s63
    %p65 = scmp.eq.s32.totalorder %s64, 0
    %s67 = sadd.s32 %s66, 1
    %s68 = scalar_select %p65, %s66, %s67
    %p71 = pneg %p65
    %p72 = scmp.eq.s32.totalorder %s12, 1
    %p73 = por %p71, %p72
    %p74 = scmp.ne.s32.totalorder %s66, %s69
    %p75 = scmp.eq.s32.totalorder %s12, 0
    %p76 = por %p74, %p75
    %p77 = scmp.ne.s32.totalorder %s66, %s69
    %p78 = scmp.eq.s32.totalorder %s17, 1
    %p79 = por %p77, %p78
    %p80 = scmp.ne.s32.totalorder %s69, %s70
    %p81 = scmp.eq.s32.totalorder %s17, 0
    %p82 = por %p80, %p81
    %p83 = scmp.ne.s32.totalorder %s69, %s70
    %p84 = scmp.eq.s32.totalorder %s18, 1
    %p85 = por %p83, %p84
    %p87 = scmp.ne.s32.totalorder %s70, %s86
    %p88 = scmp.eq.s32.totalorder %s18, 0
    %p89 = por %p87, %p88
    %s91 = sadd.s32 %s90, 1
    %p94 = scmp.eq.s32.totalorder %s12, 1
    %p95 = scmp.ne.s32.totalorder %s90, %s92
    %p96 = scmp.eq.s32.totalorder %s12, 0
    %p97 = por %p95, %p96
    %p98 = scmp.ne.s32.totalorder %s90, %s92
    %p99 = scmp.eq.s32.totalorder %s17, 1
    %p100 = por %p98, %p99
    %p101 = scmp.ne.s32.totalorder %s92, %s93
    %p102 = scmp.eq.s32.totalorder %s17, 0
    %p103 = por %p101, %p102
    %p104 = scmp.ne.s32.totalorder %s92, %s93
    %p105 = scmp.eq.s32.totalorder %s18, 1
    %p106 = por %p104, %p105
    %p108 = scmp.ne.s32.totalorder %s93, %s107
    %p109 = scmp.eq.s32.totalorder %s18, 0
    %p110 = por %p108, %p109
    %s112 = sadd.s32 %s111, 1
    %p115 = scmp.eq.s32.totalorder %s12, 1
    %p116 = scmp.ne.s32.totalorder %s111, %s113
    %p117 = scmp.eq.s32.totalorder %s12, 0
    %p118 = por %p116, %p117
    %p119 = scmp.ne.s32.totalorder %s111, %s113
    %p120 = scmp.eq.s32.totalorder %s17, 1
    %p121 = por %p119, %p120
    %p122 = scmp.ne.s32.totalorder %s113, %s114
    %p123 = scmp.eq.s32.totalorder %s17, 0
    %p124 = por %p122, %p123
    %p125 = scmp.ne.s32.totalorder %s113, %s114
    %p126 = scmp.eq.s32.totalorder %s18, 1
    %p127 = por %p125, %p126
    %p129 = scmp.ne.s32.totalorder %s114, %s128
    %p130 = scmp.eq.s32.totalorder %s18, 0
    %p131 = por %p129, %p130
    %s133 = sadd.s32 %s132, 1
    %p136 = scmp.eq.s32.totalorder %s12, 1
    %p137 = scmp.ne.s32.totalorder %s132, %s134
    %p138 = scmp.eq.s32.totalorder %s12, 0
    %p139 = por %p137, %p138
    %p140 = scmp.ne.s32.totalorder %s132, %s134
    %p141 = scmp.eq.s32.totalorder %s17, 1
    %p142 = por %p140, %p141
    %p143 = scmp.ne.s32.totalorder %s134, %s135
    %p144 = scmp.eq.s32.totalorder %s17, 0
    %p145 = por %p143, %p144
    %p146 = scmp.ne.s32.totalorder %s134, %s135
    %p147 = scmp.eq.s32.totalorder %s18, 1
    %p148 = por %p146, %p147
    %p150 = scmp.ne.s32.totalorder %s135, %s149
    %p151 = scmp.eq.s32.totalorder %s18, 0
    %p152 = por %p150, %p151
    %s154 = sadd.s32 %s153, 1
    %p157 = scmp.eq.s32.totalorder %s12, 1
    %p158 = scmp.ne.s32.totalorder %s153, %s155
    %p159 = scmp.eq.s32.totalorder %s12, 0
    %p160 = por %p158, %p159
    %p161 = scmp.ne.s32.totalorder %s153, %s155
    %p162 = scmp.eq.s32.totalorder %s17, 1
    %p163 = por %p161, %p162
    %p164 = scmp.ne.s32.totalorder %s155, %s156
    %p165 = scmp.eq.s32.totalorder %s17, 0
    %p166 = por %p164, %p165
    %p167 = scmp.ne.s32.totalorder %s155, %s156
    %p168 = scmp.eq.s32.totalorder %s18, 1
    %p169 = por %p167, %p168
    %p171 = scmp.ne.s32.totalorder %s156, %s170
    %p172 = scmp.eq.s32.totalorder %s18, 0
    %p173 = por %p171, %p172
    %s174 = ssub.s32 %s19, %s31
    %s175 = ssub.s32 %s20, %s27
    %s176 = sor.u32 %s174, %s175
    %p177 = scmp.eq.s32.totalorder %s176, 0
    %s179 = sadd.s32 %s178, 1
    %s180 = scalar_select %p177, %s178, %s179
    %p183 = pneg %p177
    %p184 = scmp.eq.s32.totalorder %s12, 1
    %p185 = por %p183, %p184
    %p186 = scmp.ne.s32.totalorder %s178, %s181
    %p187 = scmp.eq.s32.totalorder %s12, 0
    %p188 = por %p186, %p187
    %p189 = scmp.ne.s32.totalorder %s178, %s181
    %p190 = scmp.eq.s32.totalorder %s17, 1
    %p191 = por %p189, %p190
    %p192 = scmp.ne.s32.totalorder %s181, %s182
    %p193 = scmp.eq.s32.totalorder %s17, 0
    %p194 = por %p192, %p193
    %p195 = scmp.ne.s32.totalorder %s181, %s182
    %p196 = scmp.eq.s32.totalorder %s18, 1
    %p197 = por %p195, %p196
    %p199 = scmp.ne.s32.totalorder %s182, %s198
    %p200 = scmp.eq.s32.totalorder %s18, 0
    %p201 = por %p199, %p200
    %p202 = scmp.le.s32.totalorder 1, %s12
    %p203 = scmp.lt.s32.totalorder %s12, 3
    %p204 = pnand %p202, %p203
    %p205 = pneg %p204
    // Predicated region
    $region9: #{mynet1_forward.6} parent=5 // pred_check
      _
    $region10: #{mynet1_forward.6} parent=5 // pred_check_branch
      %207 = sbr.rel (%p204) target = $region12
    $region11: #{mynet1_forward.6} parent=5 // pred_region
      %s208 = ssub.s32 %s12, 1
      // Predicated region
      $region13: #{mynet1_forward.6} parent=11 // pred_check
        %p209 = pneg %p103
      $region14: #{mynet1_forward.6} parent=11 // pred_check_branch
        %211 = sbr.rel (%p209) target = $region16
      $region15: #{mynet1_forward.6} parent=11 // pred_region
        _
      $region16: #{mynet1_forward.6} parent=11 // pred_fallthru
        _
      // Predicated region
      $region17: #{mynet1_forward.6} parent=11 // pred_check
        %p212 = pneg %p124
      $region18: #{mynet1_forward.6} parent=11 // pred_check_branch
        %214 = sbr.rel (%p212) target = $region20
      $region19: #{mynet1_forward.6} parent=11 // pred_region
        _
      $region20: #{mynet1_forward.6} parent=11 // pred_fallthru
        _
      // Predicated region
      $region21: #{mynet1_forward.6} parent=11 // pred_check
        %p215 = pneg %p145
      $region22: #{mynet1_forward.6} parent=11 // pred_check_branch
        %217 = sbr.rel (%p215) target = $region24
      $region23: #{mynet1_forward.6} parent=11 // pred_region
        _
      $region24: #{mynet1_forward.6} parent=11 // pred_fallthru
        _
      // Predicated region
      $region25: #{mynet1_forward.6} parent=11 // pred_check
        %p218 = pneg %p166
      $region26: #{mynet1_forward.6} parent=11 // pred_check_branch
        %220 = sbr.rel (%p218) target = $region28
      $region27: #{mynet1_forward.6} parent=11 // pred_region
        _
      $region28: #{mynet1_forward.6} parent=11 // pred_fallthru
        _
    $region12: #{mynet1_forward.6} parent=5 // pred_fallthru
      _
    %p221 = scmp.lt.s32.totalorder %s12, 2
    // Predicated region
    $region29: #{mynet1_forward.6} parent=5 // pred_check
      %p222 = pneg %p221
    $region30: #{mynet1_forward.6} parent=5 // pred_check_branch
      %224 = sbr.rel (%p222) target = $region32
    $region31: #{mynet1_forward.6} parent=5 // pred_region
      // Predicated region
      $region33: #{mynet1_forward.6} parent=31 // pred_check
        %p225 = pneg %p46
      $region34: #{mynet1_forward.6} parent=31 // pred_check_branch
        %227 = sbr.rel (%p225) target = $region36
      $region35: #{mynet1_forward.6} parent=31 // pred_region
        %p228 = scmp.lt.s32.totalorder %s19, 1
        %s229 = scalar_select %p228, %s19, 1
        %p230 = scmp.lt.s32.totalorder %s20, 1
        %s231 = scalar_select %p230, %s20, 1
        %s232 = smul.addr %s229, 2
        %s233 = sadd.s32 %s231, %s232
        %s234 = smul.addr %s233, 2
        %s235 = scalar_lea.vmem %s0, %s234
      $region36: #{mynet1_forward.6} parent=31 // pred_fallthru
        _
      // Predicated region
      $region37: #{mynet1_forward.6} parent=31 // pred_check
        %p236 = pneg %p76
      $region38: #{mynet1_forward.6} parent=31 // pred_check_branch
        %238 = sbr.rel (%p236) target = $region40
      $region39: #{mynet1_forward.6} parent=31 // pred_region
        %s239 = sadd.s32 %s20, 1
        %p240 = scmp.lt.s32.totalorder %s19, 1
        %s241 = scalar_select %p240, %s19, 1
        %p242 = scmp.lt.s32.totalorder %s239, 1
        %s243 = scalar_select %p242, %s239, 1
        %s244 = smul.addr %s241, 2
        %s245 = sadd.s32 %s243, %s244
        %s246 = smul.addr %s245, 2
        %s247 = scalar_lea.vmem %s1, %s246
        %s248 = sadd.s32 %s20, 1
      $region40: #{mynet1_forward.6} parent=31 // pred_fallthru
        _
    $region32: #{mynet1_forward.6} parent=5 // pred_fallthru
      _
    %p249 = scmp.le.s32.totalorder 1, %s12
    %p250 = scmp.lt.s32.totalorder %s12, 3
    %p251 = pnand %p249, %p250
    %p252 = pneg %p251
    // Predicated region
    $region41: #{mynet1_forward.6} parent=5 // pred_check
      _
    $region42: #{mynet1_forward.6} parent=5 // pred_check_branch
      %254 = sbr.rel (%p251) target = $region44
    $region43: #{mynet1_forward.6} parent=5 // pred_region
      %s255 = ssub.s32 %s12, 1
      %p256 = scmp.lt.s32.totalorder %s21, 1
      %s257 = scalar_select %p256, %s21, 1
      %p258 = scmp.lt.s32.totalorder %s22, 1
      %s259 = scalar_select %p258, %s22, 1
      %s260 = smul.addr %s257, 2
      %s261 = sadd.s32 %s259, %s260
      %s262 = smul.addr %s261, 2
      %s263 = scalar_lea.vmem %s0, %s262
      %p264 = pneg %p52
      %p265 = pneg %p49
      %s266 = sadd.s32 %s22, 1
      %p267 = scmp.lt.s32.totalorder %s21, 1
      %s268 = scalar_select %p267, %s21, 1
      %p269 = scmp.lt.s32.totalorder %s266, 1
      %s270 = scalar_select %p269, %s266, 1
      %s271 = smul.addr %s268, 2
      %s272 = sadd.s32 %s270, %s271
      %s273 = smul.addr %s272, 2
      %s274 = scalar_lea.vmem %s1, %s273
      %p275 = pneg %p82
      %p276 = pneg %p79
      %p277 = pneg %p103
      %p278 = pneg %p100
      %p279 = pneg %p124
      %p280 = pneg %p121
      %p281 = pneg %p145
      %p282 = pneg %p142
      %p283 = pneg %p166
      %p284 = pneg %p163
      %p285 = pneg %p194
      %p286 = pneg %p191
      %p287 = scmp.lt.s32.totalorder %s21, 1
      %s288 = scalar_select %p287, %s21, 1
      %p289 = scmp.lt.s32.totalorder %s22, 0
      %s290 = scalar_select %p289, %s22, 0
      %s291 = sadd.s32 %s290, %s288
      %s292 = smul.addr %s291, 4
      %s293 = scalar_lea.vmem %s6, %s292
      %p294 = scmp.lt.s32.totalorder %s21, 1
      %s295 = scalar_select %p294, %s21, 1
      %p296 = scmp.lt.s32.totalorder %s22, 1
      %s297 = scalar_select %p296, %s22, 1
      %s298 = smul.addr %s295, 2
      %s299 = sadd.s32 %s297, %s298
      %s300 = smul.addr %s299, 2
      %s301 = scalar_lea.vmem %s0, %s300
      %s302 = sadd.s32 %s22, 1
      %p303 = scmp.lt.s32.totalorder %s21, 1
      %s304 = scalar_select %p303, %s21, 1
      %p305 = scmp.lt.s32.totalorder %s302, 1
      %s306 = scalar_select %p305, %s302, 1
      %s307 = smul.addr %s304, 2
      %s308 = sadd.s32 %s306, %s307
      %s309 = smul.addr %s308, 2
      %s310 = scalar_lea.vmem %s1, %s309
      %s311 = sadd.s32 %s22, 1
      %p312 = scmp.lt.s32.totalorder %s21, 1
      %s313 = scalar_select %p312, %s21, 1
      %p314 = scmp.lt.s32.totalorder %s22, 0
      %s315 = scalar_select %p314, %s22, 0
      %s316 = sadd.s32 %s315, %s313
      %s317 = smul.addr %s316, 4
      %s318 = scalar_lea.vmem %s6, %s317
      %v320 = vld [vmem:[%s301] sm:$0x3]
      %v321 = vld [vmem:[%s310] sm:$0x3]
      %v322 = vunpack.c.l.bf16 %v320
      %v323 = vunpack.c.l.bf16 %v321
      %v324 = vld [vmem:[%s2] sm:$0x7]
      %326 = vset.pattern.permute.xlu0 0
      %327 = vperm.xlu0 %326, %v324
      %v328 = vpop.permute.xlu0 %327
      %v330 = vmul.f32 %v322, %v328
      %v331 = vmul.f32 %v323, %v328
      %v332 = vld [vmem:[%s3] sm:$0x7]
      %334 = vset.pattern.permute.xlu0 0
      %335 = vperm.xlu0 %334, %v332
      %v336 = vpop.permute.xlu0 %335
      %v338 = vadd.f32 %v330, %v336
      %v339 = vadd.f32 %v331, %v336
      %v340 = vmax.f32 %v338, 0.0
      %v341 = vmax.f32 %v339, 0.0
      %v342 = vpack.c.bf16 %v340, %v340
      %v343 = vpack.c.bf16 %v341, %v341
      %v345 = vshrl.u32 %v342, 16
      %v347 = vrot.slane %v345, 6
      %v348 = vshll.u32 %v342, 16
      %v350 = vrot.slane %v348, 7
      %v351 = vor.u32 %v347, %v350
      %v353 = vshrl.u32 %v343, 16
      %v355 = vrot.slane %v353, 6
      %v356 = vshll.u32 %v343, 16
      %v358 = vrot.slane %v356, 7
      %v359 = vor.u32 %v355, %v358
      %360 = vrot.lane.b32.xlu0 %v351, 127
      %v361 = vpop.permute.xlu0 %360
      %362 = vrot.lane.b32.xlu0 %v359, 127
      %v363 = vpop.permute.xlu0 %362
      %vm364 = vcmask 1039360
      %v365 = vsel %vm364, %v361, %v363
      %v369 = vrot.slane %v342, 5
      %v370 = vrot.slane %v343, 5
      %371 = vrot.lane.b32.xlu0 %v369, 126
      %v372 = vpop.permute.xlu0 %371
      %373 = vrot.lane.b32.xlu0 %v370, 126
      %v374 = vpop.permute.xlu0 %373
      %vm375 = vcmask 1031168
      %v376 = vsel %vm375, %v372, %v374
      %v377 = vrot.slane %v345, 3
      %v378 = vrot.slane %v348, 4
      %v379 = vor.u32 %v377, %v378
      %v380 = vrot.slane %v353, 3
      %v381 = vrot.slane %v356, 4
      %v382 = vor.u32 %v380, %v381
      %383 = vrot.lane.b32.xlu0 %v379, 120
      %v384 = vpop.permute.xlu0 %383
      %385 = vrot.lane.b32.xlu0 %v382, 120
      %v386 = vpop.permute.xlu0 %385
      %vm387 = vcmask 982016
      %v388 = vsel %vm387, %v384, %v386
      %v390 = vrot.slane %v342, 2
      %v391 = vrot.slane %v343, 2
      %392 = vrot.lane.b32.xlu0 %v390, 119
      %v393 = vpop.permute.xlu0 %392
      %394 = vrot.lane.b32.xlu0 %v391, 119
      %v395 = vpop.permute.xlu0 %394
      %vm396 = vcmask 973824
      %v397 = vsel %vm396, %v393, %v395
      %v398 = vrot.slane %v348, 1
      %v399 = vrot.slane %v356, 1
      %v400 = vor.u32 %v345, %v398
      %v401 = vor.u32 %v353, %v399
      %402 = vrot.lane.b32.xlu0 %v398, 118
      %v403 = vpop.permute.xlu0 %402
      %404 = vrot.lane.b32.xlu0 %v399, 118
      %v405 = vpop.permute.xlu0 %404
      %406 = vrot.lane.b32.xlu0 %v400, 118
      %v407 = vpop.permute.xlu0 %406
      %408 = vrot.lane.b32.xlu0 %v401, 118
      %v409 = vpop.permute.xlu0 %408
      %vm410 = vcmask 965632
      %v411 = vsel %vm410, %v403, %v405
      %v412 = vsel %vm410, %v407, %v409
      %v414 = vrot.slane %v342, 7
      %v415 = vrot.slane %v343, 7
      %416 = vrot.lane.b32.xlu0 %v414, 112
      %v417 = vpop.permute.xlu0 %416
      %418 = vrot.lane.b32.xlu0 %v415, 112
      %v419 = vpop.permute.xlu0 %418
      %vm420 = vcmask 916480
      %v421 = vsel %vm420, %v417, %v419
      %v422 = vrot.slane %v345, 5
      %v423 = vrot.slane %v348, 6
      %v424 = vor.u32 %v422, %v423
      %v425 = vrot.slane %v353, 5
      %v426 = vrot.slane %v356, 6
      %v427 = vor.u32 %v425, %v426
      %428 = vrot.lane.b32.xlu0 %v424, 111
      %v429 = vpop.permute.xlu0 %428
      %430 = vrot.lane.b32.xlu0 %v427, 111
      %v431 = vpop.permute.xlu0 %430
      %vm432 = vcmask 908288
      %v433 = vsel %vm432, %v429, %v431
      %v435 = vrot.slane %v342, 4
      %v436 = vrot.slane %v343, 4
      %437 = vrot.lane.b32.xlu0 %v435, 110
      %v438 = vpop.permute.xlu0 %437
      %439 = vrot.lane.b32.xlu0 %v436, 110
      %v440 = vpop.permute.xlu0 %439
      %vm441 = vcmask 900096
      %v442 = vsel %vm441, %v438, %v440
      %vm443 = vcmask 1041408
      %vm444 = vsmask.f32 1280
      %vm445 = vmand %vm443, %vm444
      %v446 = vsel %vm445, %v342, %v365
      %vm447 = vcmask 1042432
      %v450 = vsel %vm447, %v446, %v376
      %vm452 = vcmask 1044480
      %vm453 = vsmask.f32 4352
      %vm454 = vmand %vm452, %vm453
      %v455 = vsel %vm454, %v450, %v388
      %vm456 = vcmask 1045504
      %v459 = vsel %vm456, %v455, %v397
      %vm461 = vcmask 1047552
      %vm462 = vsmask.f32 7424
      %vm463 = vmand %vm461, %vm462
      %v464 = vsel %vm463, %v459, %v411
      %vm465 = vcmask 1040384
      %v468 = vsel %vm465, %v412, %v421
      %vm470 = vcmask 1042432
      %vm471 = vsmask.f32 2304
      %vm472 = vmand %vm470, %vm471
      %v473 = vsel %vm472, %v468, %v433
      %vm474 = vcmask 1043456
      %v477 = vsel %vm474, %v473, %v442
      %v478 = vld [vmem:[%s4] sm:$0x7]
      %v479 = vld [vmem:[%s5] sm:$0x3f]
      %481 = vset.pattern.permute.xlu0 0
      %482 = vperm.xlu0 %481, %v479
      %v483 = vpop.permute.xlu0 %482
      %vm485 = vcmask 220160
      %v487 = vsel %vm485, %v478, 0
      %vm489 = vcmask 1044480
      %v490 = vsel %vm489, 4294967295, 65535
      %v491 = vsel %vm456, %v490, 0
      %v492 = vand.u32 %v477, %v491
      %494 = vmatprep.subr.bf16.mxu0 0
      %495 = vmatpush1.bf16.msra.mxu0 %v464
      %496 = vmatprep.subr.bf16.mxu0 0
      %497 = vmatpush1.bf16.msra.mxu0 %v492
      %498 = vmatprep.subr.bf16.mxu0 0
      %499 = vmatpush1.bf16.msra.mxu0 0
      %500 = vmatprep.subr.bf16.mxu0 0
      %501 = vmatpush1.bf16.msra.mxu0 0
      %502 = vmatprep.subr.bf16.mxu0 0
      %503 = vmatpush1.bf16.msra.mxu0 0
      %504 = vmatprep.subr.bf16.mxu0 0
      %505 = vmatpush1.bf16.msra.mxu0 0
      %506 = vmatprep.subr.bf16.mxu0 0
      %507 = vmatpush1.bf16.msra.mxu0 0
      %508 = vmatprep.subr.bf16.mxu0 0
      %509 = vmatpush1.bf16.msra.mxu0 0
      %510 = vmatprep.subr.bf16.mxu0 0
      %511 = vmatpush1.bf16.msra.mxu0 0
      %512 = vmatprep.subr.bf16.mxu0 0
      %513 = vmatpush1.bf16.msra.mxu0 0
      %514 = vmatprep.subr.bf16.mxu0 0
      %515 = vmatpush1.bf16.msra.mxu0 0
      %516 = vmatprep.subr.bf16.mxu0 0
      %517 = vmatpush1.bf16.msra.mxu0 0
      %518 = vmatprep.subr.bf16.mxu0 0
      %519 = vmatpush1.bf16.msra.mxu0 0
      %520 = vmatprep.subr.bf16.mxu0 0
      %521 = vmatpush1.bf16.msra.mxu0 0
      %522 = vmatprep.subr.bf16.mxu0 0
      %523 = vmatpush1.bf16.msra.mxu0 0
      %524 = vmatprep.subr.bf16.mxu0 0
      %525 = vmatpush1.bf16.msra.mxu0 0
      %526 = vmatprep.mubr.bf16.mxu0 0
      %527 = vmatmul.mubr.bf16.gmra.mrb[0].mxu0 %v487
      %v528 = vpop.f32.mrb[0].mxu0
      %v529 = vadd.f32 %v483, %v528
      %v530 = vpop.f32.mrb[0].mxu0
      %v531 = vpop.f32.mrb[0].mxu0
      %v532 = vpop.f32.mrb[0].mxu0
      %533 = vdwg.mxu0
      %v534 = vpack.c.bf16 %v529, %v529
      %535 = vst [vmem:[%s318] sm:$0x7] %v534
      %p536 = scmp.lt.s32.totalorder %s21, 1
      %s537 = scalar_select %p536, %s21, 1
      %p538 = scmp.lt.s32.totalorder %s22, 0
      %s539 = scalar_select %p538, %s22, 0
      %s540 = sadd.s32 %s539, %s537
      %s541 = smul.addr %s540, 4
      %s542 = scalar_lea.vmem %s6, %s541
      // Predicated region
      $region45: #{mynet1_forward.6} parent=43 // pred_check
        %p543 = pneg %p191
      $region46: #{mynet1_forward.6} parent=43 // pred_check_branch
        %545 = sbr.rel (%p543) target = $region48
      $region47: #{mynet1_forward.6} parent=43 // pred_region
        _
      $region48: #{mynet1_forward.6} parent=43 // pred_fallthru
        _
    $region44: #{mynet1_forward.6} parent=5 // pred_fallthru
      _
    %p546 = scmp.le.s32.totalorder 2, %s12
    // Predicated region
    $region49: #{mynet1_forward.6} parent=5 // pred_check
      %p547 = pneg %p546
    $region50: #{mynet1_forward.6} parent=5 // pred_check_branch
      %549 = sbr.rel (%p547) target = $region52
    $region51: #{mynet1_forward.6} parent=5 // pred_region
      %s550 = ssub.s32 %s12, 2
      // Predicated region
      $region53: #{mynet1_forward.6} parent=51 // pred_check
        %p551 = pneg %p197
      $region54: #{mynet1_forward.6} parent=51 // pred_check_branch
        %553 = sbr.rel (%p551) target = $region56
      $region55: #{mynet1_forward.6} parent=51 // pred_region
        %p554 = scmp.lt.s32.totalorder %s23, 1
        %s555 = scalar_select %p554, %s23, 1
        %p556 = scmp.lt.s32.totalorder %s24, 0
        %s557 = scalar_select %p556, %s24, 0
        %s558 = sadd.s32 %s557, %s555
        %s559 = smul.addr %s558, 4
        %s560 = scalar_lea.vmem %s6, %s559
      $region56: #{mynet1_forward.6} parent=51 // pred_fallthru
        _
    $region52: #{mynet1_forward.6} parent=5 // pred_fallthru
      _
  $region6: #{mynet1_forward.6} parent=0 // loop_footer
    %s16 = sadd.s32 1, %s12
  $region7: #{mynet1_forward.6} parent=0 // loop_footer_branch
    %11 = sbr.rel target = $region3
  $region8: #{mynet1_forward.6} parent=0 // loop_exit
    _

// kernel: mynet1_forward.7
$region0: #{mynet1_forward.7}
  #allocation0 [shape = 'u32[]', space=smem, size = 0x4, offset = 0x4, fixed_abs, tag = 'smem constant byte address 0x4 - core index']
  #allocation1 [shape = 'u32[144,128]{1,0:T(1,128)}', space=vmem, size = 0x12000, scoped, tag = 'internal scratch']
  %s0 = inlined_call_operand.vmem [shape: bf16[2,256], index: 0, kind: input, shape index: {}]
  %s1 = inlined_call_operand.vmem [shape: bf16[256,120], index: 1, kind: input, shape index: {}]
  %s2 = inlined_call_operand.vmem [shape: f32[2,2,120], index: 2, kind: output, shape index: {}]
  %s3 = sld [smem:[#allocation0]]
  $region45: #{mynet1_forward.7} parent=0
    _
  %s5 = ssub.s32 1, %s3
  %s6 = scalar_select 0, %s5, %s3
  loop: start=0, step=1, limit=4
  $region2: #{mynet1_forward.7} parent=0 // loop_pre_header
    _
  $region3: #{mynet1_forward.7} parent=0 // loop_header
    %s8 = sphi 0, %s12
    %p9 = scmp.ge.s32.totalorder %s8, 4
    %s15 = sphi 0, %s27
    %s16 = sphi 0, %s23
    %s17 = sphi 0, %s15
    %s18 = sphi 0, %s16
    %s19 = sphi 0, %s17
    %s20 = sphi 0, %s18
    %s32 = sphi 0, %s34
    %s35 = sphi 0, %s32
    %s36 = sphi 0, %s35
    %s52 = sphi 0, %s36
    %s60 = sphi 0, %s62
    %s63 = sphi 0, %s60
    %s64 = sphi 0, %s63
    %s80 = sphi 0, %s64
    %s86 = sphi 0, %s88
    %s89 = sphi 0, %s86
    %s90 = sphi 0, %s89
    %s106 = sphi 0, %s90
  $region4: #{mynet1_forward.7} parent=0 // loop_header_branch
    %11 = sbr.rel (%p9) target = $region8
  $region5: #{mynet1_forward.7} parent=0 // loop_body
    %s13 = ssub.s32 %s8, 1
    %s14 = ssub.s32 %s8, 2
    %s21 = sadd.s32 1, %s16
    %p22 = scmp.ge.s32.totalorder %s21, 1
    %s23 = scalar_select %p22, 0, %s21
    %s24 = sadd.s32 1, %s15
    %s25 = scalar_select %p22, %s24, %s15
    %p26 = scmp.ge.s32.totalorder %s25, 2
    %s27 = scalar_select %p26, 0, %s25
    %s28 = sadd.s32 %s15, %s16
    %s29 = sadd.s32 %s27, %s23
    %s30 = ssub.s32 %s28, %s29
    %p31 = scmp.eq.s32.totalorder %s30, 0
    %s33 = sadd.s32 %s32, 1
    %s34 = scalar_select %p31, %s32, %s33
    %p37 = pneg %p31
    %p38 = scmp.eq.s32.totalorder %s8, 1
    %p39 = por %p37, %p38
    %p40 = scmp.ne.s32.totalorder %s32, %s35
    %p41 = scmp.eq.s32.totalorder %s8, 0
    %p42 = por %p40, %p41
    %p43 = scmp.ne.s32.totalorder %s32, %s35
    %p44 = scmp.eq.s32.totalorder %s13, 1
    %p45 = por %p43, %p44
    %p46 = scmp.ne.s32.totalorder %s35, %s36
    %p47 = scmp.eq.s32.totalorder %s13, 0
    %p48 = por %p46, %p47
    %p49 = scmp.ne.s32.totalorder %s35, %s36
    %p50 = scmp.eq.s32.totalorder %s14, 1
    %p51 = por %p49, %p50
    %p53 = scmp.ne.s32.totalorder %s36, %s52
    %p54 = scmp.eq.s32.totalorder %s14, 0
    %p55 = por %p53, %p54
    %s56 = sadd.s32 %s15, %s16
    %s57 = sadd.s32 %s27, %s23
    %s58 = ssub.s32 %s56, %s57
    %p59 = scmp.eq.s32.totalorder %s58, 0
    %s61 = sadd.s32 %s60, 1
    %s62 = scalar_select %p59, %s60, %s61
    %p65 = pneg %p59
    %p66 = scmp.eq.s32.totalorder %s8, 1
    %p67 = por %p65, %p66
    %p68 = scmp.ne.s32.totalorder %s60, %s63
    %p69 = scmp.eq.s32.totalorder %s8, 0
    %p70 = por %p68, %p69
    %p71 = scmp.ne.s32.totalorder %s60, %s63
    %p72 = scmp.eq.s32.totalorder %s13, 1
    %p73 = por %p71, %p72
    %p74 = scmp.ne.s32.totalorder %s63, %s64
    %p75 = scmp.eq.s32.totalorder %s13, 0
    %p76 = por %p74, %p75
    %p77 = scmp.ne.s32.totalorder %s63, %s64
    %p78 = scmp.eq.s32.totalorder %s14, 1
    %p79 = por %p77, %p78
    %p81 = scmp.ne.s32.totalorder %s64, %s80
    %p82 = scmp.eq.s32.totalorder %s14, 0
    %p83 = por %p81, %p82
    %s84 = ssub.s32 %s15, %s27
    %p85 = scmp.eq.s32.totalorder %s84, 0
    %s87 = sadd.s32 %s86, 1
    %s88 = scalar_select %p85, %s86, %s87
    %p91 = pneg %p85
    %p92 = scmp.eq.s32.totalorder %s8, 1
    %p93 = por %p91, %p92
    %p94 = scmp.ne.s32.totalorder %s86, %s89
    %p95 = scmp.eq.s32.totalorder %s8, 0
    %p96 = por %p94, %p95
    %p97 = scmp.ne.s32.totalorder %s86, %s89
    %p98 = scmp.eq.s32.totalorder %s13, 1
    %p99 = por %p97, %p98
    %p100 = scmp.ne.s32.totalorder %s89, %s90
    %p101 = scmp.eq.s32.totalorder %s13, 0
    %p102 = por %p100, %p101
    %p103 = scmp.ne.s32.totalorder %s89, %s90
    %p104 = scmp.eq.s32.totalorder %s14, 1
    %p105 = por %p103, %p104
    %p107 = scmp.ne.s32.totalorder %s90, %s106
    %p108 = scmp.eq.s32.totalorder %s14, 0
    %p109 = por %p107, %p108
    %p110 = scmp.le.s32.totalorder 1, %s8
    %p111 = scmp.lt.s32.totalorder %s8, 3
    %p112 = pnand %p110, %p111
    %p113 = pneg %p112
    // Predicated region
    $region9: #{mynet1_forward.7} parent=5 // pred_check
      _
    $region10: #{mynet1_forward.7} parent=5 // pred_check_branch
      %115 = sbr.rel (%p112) target = $region12
    $region11: #{mynet1_forward.7} parent=5 // pred_region
      %s116 = ssub.s32 %s8, 1
    $region12: #{mynet1_forward.7} parent=5 // pred_fallthru
      _
    %p117 = scmp.lt.s32.totalorder %s8, 2
    // Predicated region
    $region13: #{mynet1_forward.7} parent=5 // pred_check
      %p118 = pneg %p117
    $region14: #{mynet1_forward.7} parent=5 // pred_check_branch
      %120 = sbr.rel (%p118) target = $region16
    $region15: #{mynet1_forward.7} parent=5 // pred_region
      // Predicated region
      $region17: #{mynet1_forward.7} parent=15 // pred_check
        %p121 = pneg %p42
      $region18: #{mynet1_forward.7} parent=15 // pred_check_branch
        %123 = sbr.rel (%p121) target = $region20
      $region19: #{mynet1_forward.7} parent=15 // pred_region
        %s124 = sadd.s32 %s15, %s16
        %p125 = scmp.lt.s32.totalorder %s124, 1
        %s126 = scalar_select %p125, %s124, 1
        %s127 = scalar_lea.vmem %s0, %s126
        %s128 = sadd.s32 %s15, %s16
      $region20: #{mynet1_forward.7} parent=15 // pred_fallthru
        _
      // Predicated region
      $region21: #{mynet1_forward.7} parent=15 // pred_check
        %p129 = pneg %p70
      $region22: #{mynet1_forward.7} parent=15 // pred_check_branch
        %131 = sbr.rel (%p129) target = $region24
      $region23: #{mynet1_forward.7} parent=15 // pred_region
        %s132 = sadd.s32 %s15, %s16
        %s133 = smul.u32 16, %s132
        %p134 = scmp.lt.s32.totalorder %s133, 31
        %s135 = scalar_select %p134, %s133, 31
        %s136 = smul.addr %s135, 4
        %s137 = scalar_lea.vmem %s1, %s136
        %s138 = sadd.s32 %s15, %s16
        %s139 = smul.u32 16, %s138
      $region24: #{mynet1_forward.7} parent=15 // pred_fallthru
        _
    $region16: #{mynet1_forward.7} parent=5 // pred_fallthru
      _
    %p140 = scmp.le.s32.totalorder 1, %s8
    %p141 = scmp.lt.s32.totalorder %s8, 3
    %p142 = pnand %p140, %p141
    %p143 = pneg %p142
    // Predicated region
    $region25: #{mynet1_forward.7} parent=5 // pred_check
      _
    $region26: #{mynet1_forward.7} parent=5 // pred_check_branch
      %145 = sbr.rel (%p142) target = $region28
    $region27: #{mynet1_forward.7} parent=5 // pred_region
      %s146 = ssub.s32 %s8, 1
      %s147 = sadd.s32 %s17, %s18
      %p148 = scmp.lt.s32.totalorder %s147, 1
      %s149 = scalar_select %p148, %s147, 1
      %s150 = scalar_lea.vmem %s0, %s149
      %p151 = pneg %p48
      %p152 = pneg %p45
      %s153 = sadd.s32 %s17, %s18
      %s154 = smul.u32 16, %s153
      %p155 = scmp.lt.s32.totalorder %s154, 31
      %s156 = scalar_select %p155, %s154, 31
      %s157 = smul.addr %s156, 4
      %s158 = scalar_lea.vmem %s1, %s157
      %p159 = pneg %p76
      %p160 = pneg %p73
      %p161 = pneg %p102
      %p162 = pneg %p99
      %p163 = scmp.lt.s32.totalorder %s17, 1
      %s164 = scalar_select %p163, %s17, 1
      %s165 = smul.addr %s164, 2
      %s166 = scalar_lea.vmem %s2, %s165
      %s167 = sadd.s32 %s17, %s18
      %p168 = scmp.lt.s32.totalorder %s167, 1
      %s169 = scalar_select %p168, %s167, 1
      %s170 = scalar_lea.vmem %s0, %s169
      %s171 = sadd.s32 %s17, %s18
      %s172 = sadd.s32 %s17, %s18
      %s173 = smul.u32 16, %s172
      %p174 = scmp.lt.s32.totalorder %s173, 31
      %s175 = scalar_select %p174, %s173, 31
      %s176 = smul.addr %s175, 4
      %s177 = scalar_lea.vmem %s1, %s176
      %s178 = sadd.s32 %s17, %s18
      %s179 = smul.u32 16, %s178
      %p180 = scmp.lt.s32.totalorder %s17, 1
      %s181 = scalar_select %p180, %s17, 1
      %s182 = smul.addr %s181, 2
      %s183 = scalar_lea.vmem %s2, %s182
      %p185 = scmp.eq.s32.totalorder %s18, 0
      // Predicated region
      $region29: #{mynet1_forward.7} parent=27 // pred_check
        %p186 = pneg %p185
      $region30: #{mynet1_forward.7} parent=27 // pred_check_branch
        %188 = sbr.rel (%p186) target = $region32
      $region31: #{mynet1_forward.7} parent=27 // pred_region
        %vm189 = vcmask 975872
        %190 = vst.msk [vmem:[%s183] sm:$0x3] %vm189, 0.0
      $region32: #{mynet1_forward.7} parent=27 // pred_fallthru
        _
      %v191 = vld [vmem:[%s183] sm:$0x3]
      %v192 = vld [vmem:[%s170] sm:$0x1]
      %v193 = vld [vmem:[%s177] sm:$0xf]
      %v194 = vld [vmem:[%s177 + $0x4] sm:$0xf]
      %v195 = vld [vmem:[%s177 + $0x8] sm:$0xf]
      %v196 = vld [vmem:[%s177 + $0xc] sm:$0xf]
      %v197 = vld [vmem:[%s177 + $0x10] sm:$0xf]
      %v198 = vld [vmem:[%s177 + $0x14] sm:$0xf]
      %v199 = vld [vmem:[%s177 + $0x18] sm:$0xf]
      %v200 = vld [vmem:[%s177 + $0x1c] sm:$0xf]
      %v201 = vld [vmem:[%s177 + $0x20] sm:$0xf]
      %v202 = vld [vmem:[%s177 + $0x24] sm:$0xf]
      %v203 = vld [vmem:[%s177 + $0x28] sm:$0xf]
      %v204 = vld [vmem:[%s177 + $0x2c] sm:$0xf]
      %v205 = vld [vmem:[%s177 + $0x30] sm:$0xf]
      %v206 = vld [vmem:[%s177 + $0x34] sm:$0xf]
      %v207 = vld [vmem:[%s177 + $0x38] sm:$0xf]
      %v208 = vld [vmem:[%s177 + $0x3c] sm:$0xf]
      %v225 = vunpack.c.l.b16 %v193
      %v226 = vunpack.c.l.b16 %v194
      %v227 = vunpack.c.l.b16 %v195
      %v228 = vunpack.c.l.b16 %v196
      %v229 = vunpack.c.l.b16 %v197
      %v230 = vunpack.c.l.b16 %v198
      %v231 = vunpack.c.l.b16 %v199
      %v232 = vunpack.c.l.b16 %v200
      %v233 = vunpack.c.l.b16 %v201
      %v234 = vunpack.c.l.b16 %v202
      %v235 = vunpack.c.l.b16 %v203
      %v236 = vunpack.c.l.b16 %v204
      %v237 = vunpack.c.l.b16 %v205
      %v238 = vunpack.c.l.b16 %v206
      %v239 = vunpack.c.l.b16 %v207
      %v240 = vunpack.c.l.b16 %v208
      %v241 = vpack.c.b16 %v226, %v225
      %v242 = vpack.c.b16 %v228, %v227
      %v243 = vpack.c.b16 %v230, %v229
      %v244 = vpack.c.b16 %v232, %v231
      %v245 = vpack.c.b16 %v234, %v233
      %v246 = vpack.c.b16 %v236, %v235
      %v247 = vpack.c.b16 %v238, %v237
      %v248 = vpack.c.b16 %v240, %v239
      %257 = vmatprep.subr.bf16.mxu0 0
      %258 = vmatpush1.bf16.msra.mxu0 %v241
      %259 = vmatprep.subr.bf16.mxu0 0
      %260 = vmatpush1.bf16.msra.mxu0 %v242
      %261 = vmatprep.subr.bf16.mxu0 0
      %262 = vmatpush1.bf16.msra.mxu0 %v243
      %263 = vmatprep.subr.bf16.mxu0 0
      %264 = vmatpush1.bf16.msra.mxu0 %v244
      %265 = vmatprep.subr.bf16.mxu0 0
      %266 = vmatpush1.bf16.msra.mxu0 %v245
      %267 = vmatprep.subr.bf16.mxu0 0
      %268 = vmatpush1.bf16.msra.mxu0 %v246
      %269 = vmatprep.subr.bf16.mxu0 0
      %270 = vmatpush1.bf16.msra.mxu0 %v247
      %271 = vmatprep.subr.bf16.mxu0 0
      %272 = vmatpush1.bf16.msra.mxu0 %v248
      %273 = vmatprep.subr.bf16.mxu0 0
      %274 = vmatpush1.bf16.msra.mxu0 0
      %275 = vmatprep.subr.bf16.mxu0 0
      %276 = vmatpush1.bf16.msra.mxu0 0
      %277 = vmatprep.subr.bf16.mxu0 0
      %278 = vmatpush1.bf16.msra.mxu0 0
      %279 = vmatprep.subr.bf16.mxu0 0
      %280 = vmatpush1.bf16.msra.mxu0 0
      %281 = vmatprep.subr.bf16.mxu0 0
      %282 = vmatpush1.bf16.msra.mxu0 0
      %283 = vmatprep.subr.bf16.mxu0 0
      %284 = vmatpush1.bf16.msra.mxu0 0
      %285 = vmatprep.subr.bf16.mxu0 0
      %286 = vmatpush1.bf16.msra.mxu0 0
      %287 = vmatprep.subr.bf16.mxu0 0
      %288 = vmatpush1.bf16.msra.mxu0 0
      %289 = vmatprep.mubr.bf16.mxu0 0
      %290 = vmatmul.mubr.bf16.gmra.mrb[0].mxu0 %v192
      %v291 = vpop.f32.mrb[0].mxu0
      %v292 = vadd.f32 0.0, %v291
      %v293 = vpop.f32.mrb[0].mxu0
      %v294 = vpop.f32.mrb[0].mxu0
      %v295 = vpop.f32.mrb[0].mxu0
      %296 = vdwg.mxu0
      %v297 = vadd.f32 %v191, %v292
      %vm298 = vcmask 975872
      %299 = vst.msk [vmem:[%s183] sm:$0x3] %vm298, %v297
      %p300 = scmp.lt.s32.totalorder %s17, 1
      %s301 = scalar_select %p300, %s17, 1
      %s302 = smul.addr %s301, 2
      %s303 = scalar_lea.vmem %s2, %s302
      // Predicated region
      $region33: #{mynet1_forward.7} parent=27 // pred_check
        %p304 = pneg %p99
      $region34: #{mynet1_forward.7} parent=27 // pred_check_branch
        %306 = sbr.rel (%p304) target = $region36
      $region35: #{mynet1_forward.7} parent=27 // pred_region
        _
      $region36: #{mynet1_forward.7} parent=27 // pred_fallthru
        _
    $region28: #{mynet1_forward.7} parent=5 // pred_fallthru
      _
    %p307 = scmp.le.s32.totalorder 2, %s8
    // Predicated region
    $region37: #{mynet1_forward.7} parent=5 // pred_check
      %p308 = pneg %p307
    $region38: #{mynet1_forward.7} parent=5 // pred_check_branch
      %310 = sbr.rel (%p308) target = $region40
    $region39: #{mynet1_forward.7} parent=5 // pred_region
      %s311 = ssub.s32 %s8, 2
      // Predicated region
      $region41: #{mynet1_forward.7} parent=39 // pred_check
        %p312 = pneg %p105
      $region42: #{mynet1_forward.7} parent=39 // pred_check_branch
        %314 = sbr.rel (%p312) target = $region44
      $region43: #{mynet1_forward.7} parent=39 // pred_region
        %p315 = scmp.lt.s32.totalorder %s19, 1
        %s316 = scalar_select %p315, %s19, 1
        %s317 = smul.addr %s316, 2
        %s318 = scalar_lea.vmem %s2, %s317
      $region44: #{mynet1_forward.7} parent=39 // pred_fallthru
        _
    $region40: #{mynet1_forward.7} parent=5 // pred_fallthru
      _
  $region6: #{mynet1_forward.7} parent=0 // loop_footer
    %s12 = sadd.s32 1, %s8
  $region7: #{mynet1_forward.7} parent=0 // loop_footer_branch
    %7 = sbr.rel target = $region3
  $region8: #{mynet1_forward.7} parent=0 // loop_exit
    _

</llo_original>
